<compile_context>
chip_gen: v6e
topology: v6e:2x2x1
jax: 0.10.0
libtpu: 0.0.40
codegen_flags: <defaults>
</compile_context>

<pallas_src>
import functools

import jax
import jax.numpy as jnp
from jax.experimental import pallas as pl
from jax.experimental.pallas import tpu as pltpu

_SUBLANE = 8     # f32 sublane quantum
_LANE = 128      # lane quantum


def _round_up(n, m):
    return ((n + m - 1) // m) * m


def lstm_kernel(x_ref, w_ih_ref, w_hh_ref, b_ref, out_ref, c_out_ref, gx_ref, *,
                hidden_size):
    """Single-invocation LSTM with densely packed gates.

    x_ref     : (T*Bp, Ep)  time-major embedded inputs (bf16 matmul operand)
    w_ih_ref  : (Ep, Gp)    input->gates weights, pre-transposed, gates packed densely
    w_hh_ref  : (Hl, Gp)    hidden->gates weights, rows [H:Hl) are zero
    b_ref     : (1, Gp)     b_ih + b_hh folded, f32
    out_ref   : (Bp, T*Hl)  all per-timestep hidden states, one lane-dense f32 slab
    c_out_ref : (Bp, Hl)    final cell state, f32
    gx_ref    : (T*Bp, Gp)  f32 VMEM scratch for the hoisted input projection
    """
    H = hidden_size
    Hl, Gp = w_hh_ref.shape
    Bp, t_hl = out_ref.shape
    T = t_hl // Hl

    # ---- Prologue: recurrence-independent input projection, one MXU pass --------
    # bf16 operands, f32 accumulation; result + bias staged in explicit VMEM scratch.
    gx_ref[...] = (
        jnp.dot(x_ref[...], w_ih_ref[...], preferred_element_type=jnp.float32)
        + b_ref[...])

    def rot_left(v, k):
        # Bring lane k to lane 0.  Static slice+concat form of a lane rotation
        # (unambiguous; Mosaic lowers it to cheap cross-lane moves).
        k = k % Gp
        if k == 0:
            return v
        return jnp.concatenate([v[:, k:], v[:, :k]], axis=-1)

    # NOTE: zero initial (h, c) plus the zero-padded W_hh rows [H:Hl) are what keep
    # the junk lanes [H:Gp) from ever contaminating valid lanes.  Nonzero initial
    # states would additionally require masking those lanes to zero.
    h = jnp.zeros((Bp, Hl), jnp.float32)
    c = jnp.zeros((Bp, Gp), jnp.float32)

    # T is small & static -> fully unrolled straight-line code (LLO-visible).
    # TODO(synk): for production T/E/H, T-chunk this with a grid / emit_pipeline
    # (h,c in VMEM scratch across an 'arbitrary' axis) so x / out stream through
    # double buffers and VMEM stays bounded on v7x's 64 MiB.
    # TODO(synk): hold W_hh resident in the MXU across steps via
    # pltpu.matmul_push_rhs / matmul_acc_lhs / matmul_pop (LHS is only Bp=8 rows,
    # so re-streaming the RHS dominates per-step MXU latency).
    for t in range(T):
        # Only the recurrent half of the projection stays on the serial chain;
        # operands bf16 (single MXU pass), accumulation f32, W_hh read from its ref.
        gates = gx_ref[t * Bp:(t + 1) * Bp, :] + jnp.dot(
            h.astype(w_hh_ref.dtype), w_hh_ref[...],
            preferred_element_type=jnp.float32)
        # Densely packed gates [i | f | g | o]: one sigmoid + one tanh over the whole
        # Gp block (vs. four per-gate EUP passes with per-gate 128 padding).
        sig = jax.nn.sigmoid(gates)          # lanes [0,H)=i, [H,2H)=f, [3H,4H)=o
        th = jnp.tanh(gates)                 # lanes [2H,3H)=g
        f_al = rot_left(sig, H)              # forget gate   -> lanes [0, H)
        g_al = rot_left(th, 2 * H)           # cell candidate-> lanes [0, H)
        o_al = rot_left(sig, 3 * H)          # output gate   -> lanes [0, H)
        c = f_al * c + sig * g_al            # sig lanes [0,H) are the input gate i
        h_full = o_al * jnp.tanh(c)          # valid in lanes [0, H); bounded junk above
        h = h_full if Gp == Hl else h_full[:, :Hl]
        # Per-step lane-aligned unmasked store (Hl % 128 == 0): bounds live ranges to
        # one step instead of keeping T hidden states alive for a final concatenate.
        out_ref[:, t * Hl:(t + 1) * Hl] = h

    c_out_ref[...] = c if Gp == Hl else c[:, :Hl]


def prepare_encoder_params(emb_table, w_ih, w_hh, b_ih, b_hh, mxu_dtype=jnp.bfloat16):
    """One-time parameter prep (do NOT redo per forward call).

    * Weights transposed to (in, gates); the 4 gates stay densely packed [i|f|g|o]
      (PyTorch order) and are padded once to Gp = round_up(4H, 128) lanes, not 128
      per gate (4x less recurrent MXU/EUP work at H=32).
    * Contraction dims zero-padded to Ep / Hl so padded x/h lanes contribute exactly 0.
    * Biases folded.  `mxu_dtype` (default bf16) casts the *matmul operands only*
      (weights here, x/h at the call site); bias, gates and all elementwise math stay
      f32 and the embedding table itself stays f32.
    """
    E = emb_table.shape[1]
    H = w_hh.shape[1]
    Ep = _round_up(E, _LANE)          # input-projection contraction width
    Hl = _round_up(H, _LANE)          # recurrent contraction / stored-h width
    Gp = _round_up(4 * H, _LANE)      # densely packed gate width
    w_dtype = jnp.float32 if mxu_dtype is None else mxu_dtype

    def pack(w, in_dim, in_pad):
        wt = jnp.transpose(w)                                     # (in, 4H)
        wt = jnp.pad(wt, ((0, in_pad - in_dim), (0, Gp - 4 * H)))
        return wt.astype(w_dtype)

    bias = jnp.pad(b_ih + b_hh, (0, Gp - 4 * H)).reshape(1, Gp).astype(jnp.float32)

    return dict(
        emb=emb_table.astype(jnp.float32),   # table stays f32 (precision of activations)
        w_ih_t=pack(w_ih, E, Ep),            # (Ep, Gp)
        w_hh_t=pack(w_hh, H, Hl),            # (Hl, Gp), rows [H:Hl) zero
        bias=bias,                           # (1, Gp)
        dims=(E, H, Ep, Hl, Gp),
        x_dtype=w_dtype,
    )


def encoder_forward(token_ids, params):
    """Encoder.forward: embedding gather (glue, time-major) + single LSTM kernel.
    Returns (outputs[B,T,H], (h[1,B,H], c[1,B,H])) like nn.LSTM(batch_first=True)."""
    B, T = token_ids.shape
    E, H, Ep, Hl, Gp = params["dims"]
    Bp = _round_up(B, _SUBLANE)
    x_dtype = params["x_dtype"]

    # Pad the *token ids* (not the gathered activations) to the sublane quantum and
    # gather time-major from the unpadded E-wide f32 table; the single lane pad E->Ep
    # and the bf16 matmul-operand cast happen on the small activation afterwards
    # (no extra full-activation HBM round trip, no 4x-inflated gather bandwidth).
    ids = jnp.pad(token_ids.T, ((0, 0), (0, Bp - B)))            # (T, Bp)
    x = jnp.take(params["emb"], ids, axis=0)                      # (T, Bp, E) f32
    x = jnp.pad(x.astype(x_dtype), ((0, 0), (0, 0), (0, Ep - E)))
    x2d = x.reshape(T * Bp, Ep)                                   # collapse rows in XLA

    in_bytes = sum(int(a.size) * a.dtype.itemsize
                   for a in (x2d, params["w_ih_t"], params["w_hh_t"], params["bias"]))
    out_bytes = (Bp * T * Hl + Bp * Hl) * 4
    scratch_bytes = T * Bp * Gp * 4
    need = in_bytes + out_bytes + scratch_bytes
    # Generation-aware scoped-VMEM cap (v5e/v6e 128 MiB, v7x 64 MiB physical); keep
    # ~25% headroom and never silently clamp below the resident working set.
    try:
        cap = int(pltpu.get_tpu_info().vmem_capacity_bytes)
    except Exception:
        cap = 64 * 2 ** 20
    vmem_limit = int(min(cap * 3 // 4, max(4 * 2 ** 20, 2 * need)))

    kernel = functools.partial(lstm_kernel, hidden_size=H)
    out_slab, c_last = pl.pallas_call(
        kernel,
        out_shape=(jax.ShapeDtypeStruct((Bp, T * Hl), jnp.float32),
                   jax.ShapeDtypeStruct((Bp, Hl), jnp.float32)),
        in_specs=[pl.BlockSpec(memory_space=pltpu.MemorySpace.VMEM)] * 4,
        out_specs=(pl.BlockSpec(memory_space=pltpu.MemorySpace.VMEM),
                   pl.BlockSpec(memory_space=pltpu.MemorySpace.VMEM)),
        scratch_shapes=[pltpu.VMEM((T * Bp, Gp), jnp.float32)],
        compiler_params=pltpu.CompilerParams(vmem_limit_bytes=vmem_limit),
    )(x2d, params["w_ih_t"], params["w_hh_t"], params["bias"])

    outputs = out_slab.reshape(Bp, T, Hl)[:B, :, :H]              # (B, T, H)
    h = outputs[:, -1, :][None]                                   # h_n == last output
    c = c_last[:B, :H][None]                                      # (1, B, H)
    return outputs, (h, c)


def _reference_encoder(token_ids, emb, w_ih, w_hh, b_ih, b_hh,
                       matmul_dtype=jnp.float32):
    """Pure-JAX reference matching nn.LSTM(batch_first=True); optionally casts the
    matmul operands to `matmul_dtype` to mirror the kernel's MXU dtype exactly."""
    x = jnp.take(emb, token_ids, axis=0)                          # (B, T, E) f32
    B = x.shape[0]
    H = w_hh.shape[1]
    w_ih_c = w_ih.astype(matmul_dtype)
    w_hh_c = w_hh.astype(matmul_dtype)
    bias = b_ih + b_hh

    def step(carry, x_t):
        h, c = carry
        gates = (jnp.dot(x_t.astype(matmul_dtype), w_ih_c.T,
                         preferred_element_type=jnp.float32)
                 + jnp.dot(h.astype(matmul_dtype), w_hh_c.T,
                           preferred_element_type=jnp.float32)
                 + bias)
        i = jax.nn.sigmoid(gates[:, 0 * H:1 * H])
        f = jax.nn.sigmoid(gates[:, 1 * H:2 * H])
        g = jnp.tanh(gates[:, 2 * H:3 * H])
        o = jax.nn.sigmoid(gates[:, 3 * H:4 * H])
        c = f * c + i * g
        h = o * jnp.tanh(c)
        return (h, c), h

    init = (jnp.zeros((B, H), jnp.float32), jnp.zeros((B, H), jnp.float32))
    (h, c), ys = jax.lax.scan(step, init, jnp.transpose(x, (1, 0, 2)))
    return jnp.transpose(ys, (1, 0, 2)), (h[None], c[None])


if __name__ == "__main__":
    vocab_size, embed_size, hidden_size = 50, 32, 32
    B, T = 2, 8

    key = jax.random.PRNGKey(0)
    k_emb, k_wih, k_whh, k_bih, k_bhh, k_ids = jax.random.split(key, 6)

    emb_table = jax.random.normal(k_emb, (vocab_size, embed_size), jnp.float32)
    bound = float(hidden_size) ** -0.5
    w_ih = jax.random.uniform(k_wih, (4 * hidden_size, embed_size), jnp.float32, -bound, bound)
    w_hh = jax.random.uniform(k_whh, (4 * hidden_size, hidden_size), jnp.float32, -bound, bound)
    b_ih = jax.random.uniform(k_bih, (4 * hidden_size,), jnp.float32, -bound, bound)
    b_hh = jax.random.uniform(k_bhh, (4 * hidden_size,), jnp.float32, -bound, bound)

    token_ids = jax.random.randint(k_ids, (B, T), 0, vocab_size, dtype=jnp.int32)

    params = prepare_encoder_params(emb_table, w_ih, w_hh, b_ih, b_hh)  # one-time prep
    outputs, (h, c) = encoder_forward(token_ids, params)
    jax.block_until_ready((outputs, h, c))

    assert outputs.shape == (B, T, hidden_size)
    assert h.shape == (1, B, hidden_size)
    assert c.shape == (1, B, hidden_size)
    assert jnp.allclose(outputs[:, -1, :], h[0], atol=1e-6)

    # Tight check vs a reference using the same bf16 MXU-operand casts: validates the
    # dense gate packing, padding and lane-rotation logic of the kernel.
    ref_out, (ref_h, ref_c) = _reference_encoder(
        token_ids, emb_table, w_ih, w_hh, b_ih, b_hh, matmul_dtype=jnp.bfloat16)
    assert jnp.allclose(outputs, ref_out, atol=2e-3, rtol=2e-3)
    assert jnp.allclose(h, ref_h, atol=2e-3, rtol=2e-3)
    assert jnp.allclose(c, ref_c, atol=2e-3, rtol=2e-3)

    # Loose sanity check vs the full-f32 reference (only MXU operands are bf16).
    f32_out, (f32_h, f32_c) = _reference_encoder(
        token_ids, emb_table, w_ih, w_hh, b_ih, b_hh, matmul_dtype=jnp.float32)
    assert jnp.allclose(outputs, f32_out, atol=5e-2, rtol=5e-2)
    assert jnp.allclose(c, f32_c, atol=5e-2, rtol=5e-2)

    print("KERNEL_OK")
</pallas_src>

<mosaic_0001>
module attributes {stable_mosaic.version = 11 : i64} {
  func.func @lstm_kernel(%arg0: memref<64x128xbf16, #tpu.memory_space<vmem>>, %arg1: memref<128x128xbf16, #tpu.memory_space<vmem>>, %arg2: memref<128x128xbf16, #tpu.memory_space<vmem>>, %arg3: memref<1x128xf32, #tpu.memory_space<vmem>>, %arg4: memref<8x1024xf32, #tpu.memory_space<vmem>>, %arg5: memref<8x128xf32, #tpu.memory_space<vmem>>, %arg6: memref<64x128xf32, #tpu.memory_space<vmem>>) attributes {dimension_semantics = [], scalar_prefetch = 0 : i64, scratch_operands = 1 : i64, tpu.core_type = #tpu.core_type<tc>} {
    %c0 = arith.constant 0 : index
    %c0_0 = arith.constant 0 : index
    %0 = vector.load %arg0[%c0, %c0_0] : memref<64x128xbf16, #tpu.memory_space<vmem>>, vector<64x128xbf16>
    %c0_1 = arith.constant 0 : index
    %c0_2 = arith.constant 0 : index
    %1 = vector.load %arg1[%c0_1, %c0_2] : memref<128x128xbf16, #tpu.memory_space<vmem>>, vector<128x128xbf16>
    %cst = arith.constant dense<0.000000e+00> : vector<64x128xf32>
    %2 = tpu.matmul %0, %1, %cst {dimension_numbers = #tpu.dot_dimension_numbers<[1], [0], [0], [1], [0, 0, 1, 1], [], []>} : vector<64x128xbf16>, vector<128x128xbf16>, vector<64x128xf32> -> vector<64x128xf32>
    %c0_3 = arith.constant 0 : index
    %c0_4 = arith.constant 0 : index
    %3 = vector.load %arg3[%c0_3, %c0_4] : memref<1x128xf32, #tpu.memory_space<vmem>>, vector<1x128xf32>
    %4 = vector.broadcast %3 : vector<1x128xf32> to vector<64x128xf32>
    %5 = arith.addf %2, %4 : vector<64x128xf32>
    %c0_5 = arith.constant 0 : index
    %c0_6 = arith.constant 0 : index
    %6 = vector.load %arg6[%c0_5, %c0_6] : memref<64x128xf32, #tpu.memory_space<vmem>>, vector<64x128xf32>
    tpu.vector_store %arg6[%c0_5, %c0_6], %5 {strides = array<i32>} : memref<64x128xf32, #tpu.memory_space<vmem>>, vector<64x128xf32>,
    %cst_7 = arith.constant 0.000000e+00 : f32
    %7 = vector.broadcast %cst_7 : f32 to vector<8x128xf32>
    %cst_8 = arith.constant 0.000000e+00 : f32
    %8 = vector.broadcast %cst_8 : f32 to vector<8x128xf32>
    %c0_9 = arith.constant 0 : index
    %c0_10 = arith.constant 0 : index
    %9 = vector.load %arg6[%c0_9, %c0_10] : memref<64x128xf32, #tpu.memory_space<vmem>>, vector<8x128xf32>
    %10 = arith.truncf %7 : vector<8x128xf32> to vector<8x128xbf16>
    %c0_11 = arith.constant 0 : index
    %c0_12 = arith.constant 0 : index
    %11 = vector.load %arg2[%c0_11, %c0_12] : memref<128x128xbf16, #tpu.memory_space<vmem>>, vector<128x128xbf16>
    %cst_13 = arith.constant dense<0.000000e+00> : vector<8x128xf32>
    %12 = tpu.matmul %10, %11, %cst_13 {dimension_numbers = #tpu.dot_dimension_numbers<[1], [0], [0], [1], [0, 0, 1, 1], [], []>} : vector<8x128xbf16>, vector<128x128xbf16>, vector<8x128xf32> -> vector<8x128xf32>
    %13 = arith.addf %9, %12 : vector<8x128xf32>
    %14 = arith.negf %13 : vector<8x128xf32>
    %15 = math.exp %14 : vector<8x128xf32>
    %cst_14 = arith.constant 1.000000e+00 : f32
    %16 = vector.broadcast %cst_14 : f32 to vector<8x128xf32>
    %17 = arith.addf %16, %15 : vector<8x128xf32>
    %18 = arith.divf %16, %17 : vector<8x128xf32>
    %19 = math.tanh %13 : vector<8x128xf32>
    %20 = vector.extract_strided_slice %18 {offsets = [0, 32], sizes = [8, 96], strides = [1, 1]} : vector<8x128xf32> to vector<8x96xf32>
    %21 = vector.extract_strided_slice %18 {offsets = [0, 0], sizes = [8, 32], strides = [1, 1]} : vector<8x128xf32> to vector<8x32xf32>
    %22 = tpu.concatenate %20, %21 in 1 : vector<8x96xf32>, vector<8x32xf32> -> vector<8x128xf32>
    %23 = vector.extract_strided_slice %19 {offsets = [0, 64], sizes = [8, 64], strides = [1, 1]} : vector<8x128xf32> to vector<8x64xf32>
    %24 = vector.extract_strided_slice %19 {offsets = [0, 0], sizes = [8, 64], strides = [1, 1]} : vector<8x128xf32> to vector<8x64xf32>
    %25 = tpu.concatenate %23, %24 in 1 : vector<8x64xf32>, vector<8x64xf32> -> vector<8x128xf32>
    %26 = vector.extract_strided_slice %18 {offsets = [0, 96], sizes = [8, 32], strides = [1, 1]} : vector<8x128xf32> to vector<8x32xf32>
    %27 = vector.extract_strided_slice %18 {offsets = [0, 0], sizes = [8, 96], strides = [1, 1]} : vector<8x128xf32> to vector<8x96xf32>
    %28 = tpu.concatenate %26, %27 in 1 : vector<8x32xf32>, vector<8x96xf32> -> vector<8x128xf32>
    %29 = arith.mulf %22, %8 : vector<8x128xf32>
    %30 = arith.mulf %18, %25 : vector<8x128xf32>
    %31 = arith.addf %29, %30 : vector<8x128xf32>
    %32 = math.tanh %31 : vector<8x128xf32>
    %33 = arith.mulf %28, %32 : vector<8x128xf32>
    %c0_15 = arith.constant 0 : index
    %c0_16 = arith.constant 0 : index
    %34 = vector.load %arg4[%c0_15, %c0_16] : memref<8x1024xf32, #tpu.memory_space<vmem>>, vector<8x128xf32>
    tpu.vector_store %arg4[%c0_15, %c0_16], %33 {strides = array<i32>} : memref<8x1024xf32, #tpu.memory_space<vmem>>, vector<8x128xf32>,
    %c8 = arith.constant 8 : index
    %c0_17 = arith.constant 0 : index
    %35 = vector.load %arg6[%c8, %c0_17] : memref<64x128xf32, #tpu.memory_space<vmem>>, vector<8x128xf32>
    %36 = arith.truncf %33 : vector<8x128xf32> to vector<8x128xbf16>
    %c0_18 = arith.constant 0 : index
    %c0_19 = arith.constant 0 : index
    %37 = vector.load %arg2[%c0_18, %c0_19] : memref<128x128xbf16, #tpu.memory_space<vmem>>, vector<128x128xbf16>
    %cst_20 = arith.constant dense<0.000000e+00> : vector<8x128xf32>
    %38 = tpu.matmul %36, %37, %cst_20 {dimension_numbers = #tpu.dot_dimension_numbers<[1], [0], [0], [1], [0, 0, 1, 1], [], []>} : vector<8x128xbf16>, vector<128x128xbf16>, vector<8x128xf32> -> vector<8x128xf32>
    %39 = arith.addf %35, %38 : vector<8x128xf32>
    %40 = arith.negf %39 : vector<8x128xf32>
    %41 = math.exp %40 : vector<8x128xf32>
    %cst_21 = arith.constant 1.000000e+00 : f32
    %42 = vector.broadcast %cst_21 : f32 to vector<8x128xf32>
    %43 = arith.addf %42, %41 : vector<8x128xf32>
    %44 = arith.divf %42, %43 : vector<8x128xf32>
    %45 = math.tanh %39 : vector<8x128xf32>
    %46 = vector.extract_strided_slice %44 {offsets = [0, 32], sizes = [8, 96], strides = [1, 1]} : vector<8x128xf32> to vector<8x96xf32>
    %47 = vector.extract_strided_slice %44 {offsets = [0, 0], sizes = [8, 32], strides = [1, 1]} : vector<8x128xf32> to vector<8x32xf32>
    %48 = tpu.concatenate %46, %47 in 1 : vector<8x96xf32>, vector<8x32xf32> -> vector<8x128xf32>
    %49 = vector.extract_strided_slice %45 {offsets = [0, 64], sizes = [8, 64], strides = [1, 1]} : vector<8x128xf32> to vector<8x64xf32>
    %50 = vector.extract_strided_slice %45 {offsets = [0, 0], sizes = [8, 64], strides = [1, 1]} : vector<8x128xf32> to vector<8x64xf32>
    %51 = tpu.concatenate %49, %50 in 1 : vector<8x64xf32>, vector<8x64xf32> -> vector<8x128xf32>
    %52 = vector.extract_strided_slice %44 {offsets = [0, 96], sizes = [8, 32], strides = [1, 1]} : vector<8x128xf32> to vector<8x32xf32>
    %53 = vector.extract_strided_slice %44 {offsets = [0, 0], sizes = [8, 96], strides = [1, 1]} : vector<8x128xf32> to vector<8x96xf32>
    %54 = tpu.concatenate %52, %53 in 1 : vector<8x32xf32>, vector<8x96xf32> -> vector<8x128xf32>
    %55 = arith.mulf %48, %31 : vector<8x128xf32>
    %56 = arith.mulf %44, %51 : vector<8x128xf32>
    %57 = arith.addf %55, %56 : vector<8x128xf32>
    %58 = math.tanh %57 : vector<8x128xf32>
    %59 = arith.mulf %54, %58 : vector<8x128xf32>
    %c0_22 = arith.constant 0 : index
    %c128 = arith.constant 128 : index
    %60 = vector.load %arg4[%c0_22, %c128] : memref<8x1024xf32, #tpu.memory_space<vmem>>, vector<8x128xf32>
    tpu.vector_store %arg4[%c0_22, %c128], %59 {strides = array<i32>} : memref<8x1024xf32, #tpu.memory_space<vmem>>, vector<8x128xf32>,
    %c16 = arith.constant 16 : index
    %c0_23 = arith.constant 0 : index
    %61 = vector.load %arg6[%c16, %c0_23] : memref<64x128xf32, #tpu.memory_space<vmem>>, vector<8x128xf32>
    %62 = arith.truncf %59 : vector<8x128xf32> to vector<8x128xbf16>
    %c0_24 = arith.constant 0 : index
    %c0_25 = arith.constant 0 : index
    %63 = vector.load %arg2[%c0_24, %c0_25] : memref<128x128xbf16, #tpu.memory_space<vmem>>, vector<128x128xbf16>
    %cst_26 = arith.constant dense<0.000000e+00> : vector<8x128xf32>
    %64 = tpu.matmul %62, %63, %cst_26 {dimension_numbers = #tpu.dot_dimension_numbers<[1], [0], [0], [1], [0, 0, 1, 1], [], []>} : vector<8x128xbf16>, vector<128x128xbf16>, vector<8x128xf32> -> vector<8x128xf32>
    %65 = arith.addf %61, %64 : vector<8x128xf32>
    %66 = arith.negf %65 : vector<8x128xf32>
    %67 = math.exp %66 : vector<8x128xf32>
    %cst_27 = arith.constant 1.000000e+00 : f32
    %68 = vector.broadcast %cst_27 : f32 to vector<8x128xf32>
    %69 = arith.addf %68, %67 : vector<8x128xf32>
    %70 = arith.divf %68, %69 : vector<8x128xf32>
    %71 = math.tanh %65 : vector<8x128xf32>
    %72 = vector.extract_strided_slice %70 {offsets = [0, 32], sizes = [8, 96], strides = [1, 1]} : vector<8x128xf32> to vector<8x96xf32>
    %73 = vector.extract_strided_slice %70 {offsets = [0, 0], sizes = [8, 32], strides = [1, 1]} : vector<8x128xf32> to vector<8x32xf32>
    %74 = tpu.concatenate %72, %73 in 1 : vector<8x96xf32>, vector<8x32xf32> -> vector<8x128xf32>
    %75 = vector.extract_strided_slice %71 {offsets = [0, 64], sizes = [8, 64], strides = [1, 1]} : vector<8x128xf32> to vector<8x64xf32>
    %76 = vector.extract_strided_slice %71 {offsets = [0, 0], sizes = [8, 64], strides = [1, 1]} : vector<8x128xf32> to vector<8x64xf32>
    %77 = tpu.concatenate %75, %76 in 1 : vector<8x64xf32>, vector<8x64xf32> -> vector<8x128xf32>
    %78 = vector.extract_strided_slice %70 {offsets = [0, 96], sizes = [8, 32], strides = [1, 1]} : vector<8x128xf32> to vector<8x32xf32>
    %79 = vector.extract_strided_slice %70 {offsets = [0, 0], sizes = [8, 96], strides = [1, 1]} : vector<8x128xf32> to vector<8x96xf32>
    %80 = tpu.concatenate %78, %79 in 1 : vector<8x32xf32>, vector<8x96xf32> -> vector<8x128xf32>
    %81 = arith.mulf %74, %57 : vector<8x128xf32>
    %82 = arith.mulf %70, %77 : vector<8x128xf32>
    %83 = arith.addf %81, %82 : vector<8x128xf32>
    %84 = math.tanh %83 : vector<8x128xf32>
    %85 = arith.mulf %80, %84 : vector<8x128xf32>
    %c0_28 = arith.constant 0 : index
    %c256 = arith.constant 256 : index
    %86 = vector.load %arg4[%c0_28, %c256] : memref<8x1024xf32, #tpu.memory_space<vmem>>, vector<8x128xf32>
    tpu.vector_store %arg4[%c0_28, %c256], %85 {strides = array<i32>} : memref<8x1024xf32, #tpu.memory_space<vmem>>, vector<8x128xf32>,
    %c24 = arith.constant 24 : index
    %c0_29 = arith.constant 0 : index
    %87 = vector.load %arg6[%c24, %c0_29] : memref<64x128xf32, #tpu.memory_space<vmem>>, vector<8x128xf32>
    %88 = arith.truncf %85 : vector<8x128xf32> to vector<8x128xbf16>
    %c0_30 = arith.constant 0 : index
    %c0_31 = arith.constant 0 : index
    %89 = vector.load %arg2[%c0_30, %c0_31] : memref<128x128xbf16, #tpu.memory_space<vmem>>, vector<128x128xbf16>
    %cst_32 = arith.constant dense<0.000000e+00> : vector<8x128xf32>
    %90 = tpu.matmul %88, %89, %cst_32 {dimension_numbers = #tpu.dot_dimension_numbers<[1], [0], [0], [1], [0, 0, 1, 1], [], []>} : vector<8x128xbf16>, vector<128x128xbf16>, vector<8x128xf32> -> vector<8x128xf32>
    %91 = arith.addf %87, %90 : vector<8x128xf32>
    %92 = arith.negf %91 : vector<8x128xf32>
    %93 = math.exp %92 : vector<8x128xf32>
    %cst_33 = arith.constant 1.000000e+00 : f32
    %94 = vector.broadcast %cst_33 : f32 to vector<8x128xf32>
    %95 = arith.addf %94, %93 : vector<8x128xf32>
    %96 = arith.divf %94, %95 : vector<8x128xf32>
    %97 = math.tanh %91 : vector<8x128xf32>
    %98 = vector.extract_strided_slice %96 {offsets = [0, 32], sizes = [8, 96], strides = [1, 1]} : vector<8x128xf32> to vector<8x96xf32>
    %99 = vector.extract_strided_slice %96 {offsets = [0, 0], sizes = [8, 32], strides = [1, 1]} : vector<8x128xf32> to vector<8x32xf32>
    %100 = tpu.concatenate %98, %99 in 1 : vector<8x96xf32>, vector<8x32xf32> -> vector<8x128xf32>
    %101 = vector.extract_strided_slice %97 {offsets = [0, 64], sizes = [8, 64], strides = [1, 1]} : vector<8x128xf32> to vector<8x64xf32>
    %102 = vector.extract_strided_slice %97 {offsets = [0, 0], sizes = [8, 64], strides = [1, 1]} : vector<8x128xf32> to vector<8x64xf32>
    %103 = tpu.concatenate %101, %102 in 1 : vector<8x64xf32>, vector<8x64xf32> -> vector<8x128xf32>
    %104 = vector.extract_strided_slice %96 {offsets = [0, 96], sizes = [8, 32], strides = [1, 1]} : vector<8x128xf32> to vector<8x32xf32>
    %105 = vector.extract_strided_slice %96 {offsets = [0, 0], sizes = [8, 96], strides = [1, 1]} : vector<8x128xf32> to vector<8x96xf32>
    %106 = tpu.concatenate %104, %105 in 1 : vector<8x32xf32>, vector<8x96xf32> -> vector<8x128xf32>
    %107 = arith.mulf %100, %83 : vector<8x128xf32>
    %108 = arith.mulf %96, %103 : vector<8x128xf32>
    %109 = arith.addf %107, %108 : vector<8x128xf32>
    %110 = math.tanh %109 : vector<8x128xf32>
    %111 = arith.mulf %106, %110 : vector<8x128xf32>
    %c0_34 = arith.constant 0 : index
    %c384 = arith.constant 384 : index
    %112 = vector.load %arg4[%c0_34, %c384] : memref<8x1024xf32, #tpu.memory_space<vmem>>, vector<8x128xf32>
    tpu.vector_store %arg4[%c0_34, %c384], %111 {strides = array<i32>} : memref<8x1024xf32, #tpu.memory_space<vmem>>, vector<8x128xf32>,
    %c32 = arith.constant 32 : index
    %c0_35 = arith.constant 0 : index
    %113 = vector.load %arg6[%c32, %c0_35] : memref<64x128xf32, #tpu.memory_space<vmem>>, vector<8x128xf32>
    %114 = arith.truncf %111 : vector<8x128xf32> to vector<8x128xbf16>
    %c0_36 = arith.constant 0 : index
    %c0_37 = arith.constant 0 : index
    %115 = vector.load %arg2[%c0_36, %c0_37] : memref<128x128xbf16, #tpu.memory_space<vmem>>, vector<128x128xbf16>
    %cst_38 = arith.constant dense<0.000000e+00> : vector<8x128xf32>
    %116 = tpu.matmul %114, %115, %cst_38 {dimension_numbers = #tpu.dot_dimension_numbers<[1], [0], [0], [1], [0, 0, 1, 1], [], []>} : vector<8x128xbf16>, vector<128x128xbf16>, vector<8x128xf32> -> vector<8x128xf32>
    %117 = arith.addf %113, %116 : vector<8x128xf32>
    %118 = arith.negf %117 : vector<8x128xf32>
    %119 = math.exp %118 : vector<8x128xf32>
    %cst_39 = arith.constant 1.000000e+00 : f32
    %120 = vector.broadcast %cst_39 : f32 to vector<8x128xf32>
    %121 = arith.addf %120, %119 : vector<8x128xf32>
    %122 = arith.divf %120, %121 : vector<8x128xf32>
    %123 = math.tanh %117 : vector<8x128xf32>
    %124 = vector.extract_strided_slice %122 {offsets = [0, 32], sizes = [8, 96], strides = [1, 1]} : vector<8x128xf32> to vector<8x96xf32>
    %125 = vector.extract_strided_slice %122 {offsets = [0, 0], sizes = [8, 32], strides = [1, 1]} : vector<8x128xf32> to vector<8x32xf32>
    %126 = tpu.concatenate %124, %125 in 1 : vector<8x96xf32>, vector<8x32xf32> -> vector<8x128xf32>
    %127 = vector.extract_strided_slice %123 {offsets = [0, 64], sizes = [8, 64], strides = [1, 1]} : vector<8x128xf32> to vector<8x64xf32>
    %128 = vector.extract_strided_slice %123 {offsets = [0, 0], sizes = [8, 64], strides = [1, 1]} : vector<8x128xf32> to vector<8x64xf32>
    %129 = tpu.concatenate %127, %128 in 1 : vector<8x64xf32>, vector<8x64xf32> -> vector<8x128xf32>
    %130 = vector.extract_strided_slice %122 {offsets = [0, 96], sizes = [8, 32], strides = [1, 1]} : vector<8x128xf32> to vector<8x32xf32>
    %131 = vector.extract_strided_slice %122 {offsets = [0, 0], sizes = [8, 96], strides = [1, 1]} : vector<8x128xf32> to vector<8x96xf32>
    %132 = tpu.concatenate %130, %131 in 1 : vector<8x32xf32>, vector<8x96xf32> -> vector<8x128xf32>
    %133 = arith.mulf %126, %109 : vector<8x128xf32>
    %134 = arith.mulf %122, %129 : vector<8x128xf32>
    %135 = arith.addf %133, %134 : vector<8x128xf32>
    %136 = math.tanh %135 : vector<8x128xf32>
    %137 = arith.mulf %132, %136 : vector<8x128xf32>
    %c0_40 = arith.constant 0 : index
    %c512 = arith.constant 512 : index
    %138 = vector.load %arg4[%c0_40, %c512] : memref<8x1024xf32, #tpu.memory_space<vmem>>, vector<8x128xf32>
    tpu.vector_store %arg4[%c0_40, %c512], %137 {strides = array<i32>} : memref<8x1024xf32, #tpu.memory_space<vmem>>, vector<8x128xf32>,
    %c40 = arith.constant 40 : index
    %c0_41 = arith.constant 0 : index
    %139 = vector.load %arg6[%c40, %c0_41] : memref<64x128xf32, #tpu.memory_space<vmem>>, vector<8x128xf32>
    %140 = arith.truncf %137 : vector<8x128xf32> to vector<8x128xbf16>
    %c0_42 = arith.constant 0 : index
    %c0_43 = arith.constant 0 : index
    %141 = vector.load %arg2[%c0_42, %c0_43] : memref<128x128xbf16, #tpu.memory_space<vmem>>, vector<128x128xbf16>
    %cst_44 = arith.constant dense<0.000000e+00> : vector<8x128xf32>
    %142 = tpu.matmul %140, %141, %cst_44 {dimension_numbers = #tpu.dot_dimension_numbers<[1], [0], [0], [1], [0, 0, 1, 1], [], []>} : vector<8x128xbf16>, vector<128x128xbf16>, vector<8x128xf32> -> vector<8x128xf32>
    %143 = arith.addf %139, %142 : vector<8x128xf32>
    %144 = arith.negf %143 : vector<8x128xf32>
    %145 = math.exp %144 : vector<8x128xf32>
    %cst_45 = arith.constant 1.000000e+00 : f32
    %146 = vector.broadcast %cst_45 : f32 to vector<8x128xf32>
    %147 = arith.addf %146, %145 : vector<8x128xf32>
    %148 = arith.divf %146, %147 : vector<8x128xf32>
    %149 = math.tanh %143 : vector<8x128xf32>
    %150 = vector.extract_strided_slice %148 {offsets = [0, 32], sizes = [8, 96], strides = [1, 1]} : vector<8x128xf32> to vector<8x96xf32>
    %151 = vector.extract_strided_slice %148 {offsets = [0, 0], sizes = [8, 32], strides = [1, 1]} : vector<8x128xf32> to vector<8x32xf32>
    %152 = tpu.concatenate %150, %151 in 1 : vector<8x96xf32>, vector<8x32xf32> -> vector<8x128xf32>
    %153 = vector.extract_strided_slice %149 {offsets = [0, 64], sizes = [8, 64], strides = [1, 1]} : vector<8x128xf32> to vector<8x64xf32>
    %154 = vector.extract_strided_slice %149 {offsets = [0, 0], sizes = [8, 64], strides = [1, 1]} : vector<8x128xf32> to vector<8x64xf32>
    %155 = tpu.concatenate %153, %154 in 1 : vector<8x64xf32>, vector<8x64xf32> -> vector<8x128xf32>
    %156 = vector.extract_strided_slice %148 {offsets = [0, 96], sizes = [8, 32], strides = [1, 1]} : vector<8x128xf32> to vector<8x32xf32>
    %157 = vector.extract_strided_slice %148 {offsets = [0, 0], sizes = [8, 96], strides = [1, 1]} : vector<8x128xf32> to vector<8x96xf32>
    %158 = tpu.concatenate %156, %157 in 1 : vector<8x32xf32>, vector<8x96xf32> -> vector<8x128xf32>
    %159 = arith.mulf %152, %135 : vector<8x128xf32>
    %160 = arith.mulf %148, %155 : vector<8x128xf32>
    %161 = arith.addf %159, %160 : vector<8x128xf32>
    %162 = math.tanh %161 : vector<8x128xf32>
    %163 = arith.mulf %158, %162 : vector<8x128xf32>
    %c0_46 = arith.constant 0 : index
    %c640 = arith.constant 640 : index
    %164 = vector.load %arg4[%c0_46, %c640] : memref<8x1024xf32, #tpu.memory_space<vmem>>, vector<8x128xf32>
    tpu.vector_store %arg4[%c0_46, %c640], %163 {strides = array<i32>} : memref<8x1024xf32, #tpu.memory_space<vmem>>, vector<8x128xf32>,
    %c48 = arith.constant 48 : index
    %c0_47 = arith.constant 0 : index
    %165 = vector.load %arg6[%c48, %c0_47] : memref<64x128xf32, #tpu.memory_space<vmem>>, vector<8x128xf32>
    %166 = arith.truncf %163 : vector<8x128xf32> to vector<8x128xbf16>
    %c0_48 = arith.constant 0 : index
    %c0_49 = arith.constant 0 : index
    %167 = vector.load %arg2[%c0_48, %c0_49] : memref<128x128xbf16, #tpu.memory_space<vmem>>, vector<128x128xbf16>
    %cst_50 = arith.constant dense<0.000000e+00> : vector<8x128xf32>
    %168 = tpu.matmul %166, %167, %cst_50 {dimension_numbers = #tpu.dot_dimension_numbers<[1], [0], [0], [1], [0, 0, 1, 1], [], []>} : vector<8x128xbf16>, vector<128x128xbf16>, vector<8x128xf32> -> vector<8x128xf32>
    %169 = arith.addf %165, %168 : vector<8x128xf32>
    %170 = arith.negf %169 : vector<8x128xf32>
    %171 = math.exp %170 : vector<8x128xf32>
    %cst_51 = arith.constant 1.000000e+00 : f32
    %172 = vector.broadcast %cst_51 : f32 to vector<8x128xf32>
    %173 = arith.addf %172, %171 : vector<8x128xf32>
    %174 = arith.divf %172, %173 : vector<8x128xf32>
    %175 = math.tanh %169 : vector<8x128xf32>
    %176 = vector.extract_strided_slice %174 {offsets = [0, 32], sizes = [8, 96], strides = [1, 1]} : vector<8x128xf32> to vector<8x96xf32>
    %177 = vector.extract_strided_slice %174 {offsets = [0, 0], sizes = [8, 32], strides = [1, 1]} : vector<8x128xf32> to vector<8x32xf32>
    %178 = tpu.concatenate %176, %177 in 1 : vector<8x96xf32>, vector<8x32xf32> -> vector<8x128xf32>
    %179 = vector.extract_strided_slice %175 {offsets = [0, 64], sizes = [8, 64], strides = [1, 1]} : vector<8x128xf32> to vector<8x64xf32>
    %180 = vector.extract_strided_slice %175 {offsets = [0, 0], sizes = [8, 64], strides = [1, 1]} : vector<8x128xf32> to vector<8x64xf32>
    %181 = tpu.concatenate %179, %180 in 1 : vector<8x64xf32>, vector<8x64xf32> -> vector<8x128xf32>
    %182 = vector.extract_strided_slice %174 {offsets = [0, 96], sizes = [8, 32], strides = [1, 1]} : vector<8x128xf32> to vector<8x32xf32>
    %183 = vector.extract_strided_slice %174 {offsets = [0, 0], sizes = [8, 96], strides = [1, 1]} : vector<8x128xf32> to vector<8x96xf32>
    %184 = tpu.concatenate %182, %183 in 1 : vector<8x32xf32>, vector<8x96xf32> -> vector<8x128xf32>
    %185 = arith.mulf %178, %161 : vector<8x128xf32>
    %186 = arith.mulf %174, %181 : vector<8x128xf32>
    %187 = arith.addf %185, %186 : vector<8x128xf32>
    %188 = math.tanh %187 : vector<8x128xf32>
    %189 = arith.mulf %184, %188 : vector<8x128xf32>
    %c0_52 = arith.constant 0 : index
    %c768 = arith.constant 768 : index
    %190 = vector.load %arg4[%c0_52, %c768] : memref<8x1024xf32, #tpu.memory_space<vmem>>, vector<8x128xf32>
    tpu.vector_store %arg4[%c0_52, %c768], %189 {strides = array<i32>} : memref<8x1024xf32, #tpu.memory_space<vmem>>, vector<8x128xf32>,
    %c56 = arith.constant 56 : index
    %c0_53 = arith.constant 0 : index
    %191 = vector.load %arg6[%c56, %c0_53] : memref<64x128xf32, #tpu.memory_space<vmem>>, vector<8x128xf32>
    %192 = arith.truncf %189 : vector<8x128xf32> to vector<8x128xbf16>
    %c0_54 = arith.constant 0 : index
    %c0_55 = arith.constant 0 : index
    %193 = vector.load %arg2[%c0_54, %c0_55] : memref<128x128xbf16, #tpu.memory_space<vmem>>, vector<128x128xbf16>
    %cst_56 = arith.constant dense<0.000000e+00> : vector<8x128xf32>
    %194 = tpu.matmul %192, %193, %cst_56 {dimension_numbers = #tpu.dot_dimension_numbers<[1], [0], [0], [1], [0, 0, 1, 1], [], []>} : vector<8x128xbf16>, vector<128x128xbf16>, vector<8x128xf32> -> vector<8x128xf32>
    %195 = arith.addf %191, %194 : vector<8x128xf32>
    %196 = arith.negf %195 : vector<8x128xf32>
    %197 = math.exp %196 : vector<8x128xf32>
    %cst_57 = arith.constant 1.000000e+00 : f32
    %198 = vector.broadcast %cst_57 : f32 to vector<8x128xf32>
    %199 = arith.addf %198, %197 : vector<8x128xf32>
    %200 = arith.divf %198, %199 : vector<8x128xf32>
    %201 = math.tanh %195 : vector<8x128xf32>
    %202 = vector.extract_strided_slice %200 {offsets = [0, 32], sizes = [8, 96], strides = [1, 1]} : vector<8x128xf32> to vector<8x96xf32>
    %203 = vector.extract_strided_slice %200 {offsets = [0, 0], sizes = [8, 32], strides = [1, 1]} : vector<8x128xf32> to vector<8x32xf32>
    %204 = tpu.concatenate %202, %203 in 1 : vector<8x96xf32>, vector<8x32xf32> -> vector<8x128xf32>
    %205 = vector.extract_strided_slice %201 {offsets = [0, 64], sizes = [8, 64], strides = [1, 1]} : vector<8x128xf32> to vector<8x64xf32>
    %206 = vector.extract_strided_slice %201 {offsets = [0, 0], sizes = [8, 64], strides = [1, 1]} : vector<8x128xf32> to vector<8x64xf32>
    %207 = tpu.concatenate %205, %206 in 1 : vector<8x64xf32>, vector<8x64xf32> -> vector<8x128xf32>
    %208 = vector.extract_strided_slice %200 {offsets = [0, 96], sizes = [8, 32], strides = [1, 1]} : vector<8x128xf32> to vector<8x32xf32>
    %209 = vector.extract_strided_slice %200 {offsets = [0, 0], sizes = [8, 96], strides = [1, 1]} : vector<8x128xf32> to vector<8x96xf32>
    %210 = tpu.concatenate %208, %209 in 1 : vector<8x32xf32>, vector<8x96xf32> -> vector<8x128xf32>
    %211 = arith.mulf %204, %187 : vector<8x128xf32>
    %212 = arith.mulf %200, %207 : vector<8x128xf32>
    %213 = arith.addf %211, %212 : vector<8x128xf32>
    %214 = math.tanh %213 : vector<8x128xf32>
    %215 = arith.mulf %210, %214 : vector<8x128xf32>
    %c0_58 = arith.constant 0 : index
    %c896 = arith.constant 896 : index
    %216 = vector.load %arg4[%c0_58, %c896] : memref<8x1024xf32, #tpu.memory_space<vmem>>, vector<8x128xf32>
    tpu.vector_store %arg4[%c0_58, %c896], %215 {strides = array<i32>} : memref<8x1024xf32, #tpu.memory_space<vmem>>, vector<8x128xf32>,
    %c0_59 = arith.constant 0 : index
    %c0_60 = arith.constant 0 : index
    %217 = vector.load %arg5[%c0_59, %c0_60] : memref<8x128xf32, #tpu.memory_space<vmem>>, vector<8x128xf32>
    tpu.vector_store %arg5[%c0_59, %c0_60], %213 {strides = array<i32>} : memref<8x128xf32, #tpu.memory_space<vmem>>, vector<8x128xf32>,
    return
  }
}

</mosaic_0001>

<llo_original>
// kernel: tpu_custom_call.1
$region0: #{tpu_custom_call.1}
  #allocation0 [shape = 'u32[]', space=smem, size = 0x4, offset = 0x4, fixed_abs, tag = 'smem constant byte address 0x4 - core index']
  #allocation1 [shape = 'u32[144,128]{1,0:T(1,128)}', space=vmem, size = 0x12000, scoped, tag = 'internal scratch']
  #allocation2 [shape = 'f32[64,128]{1,0:T(8,128)}', space=vmem, size = 0x8000, scoped, tag = 'scratch operand']
  %s0 = inlined_call_operand.hbm [shape: bf16[64,128], index: 0, kind: input, shape index: {}]
  %s1 = inlined_call_operand.hbm [shape: bf16[128,128], index: 1, kind: input, shape index: {}]
  %s2 = inlined_call_operand.hbm [shape: bf16[128,128], index: 2, kind: input, shape index: {}]
  %s3 = inlined_call_operand.vmem [shape: f32[1,128], index: 3, kind: input, shape index: {}]
  %s4 = inlined_call_operand.hbm [shape: f32[8,1024], index: 4, kind: output, shape index: {0}]
  %s5 = inlined_call_operand.hbm [shape: f32[8,128], index: 5, kind: output, shape index: {1}]
  %6 = xla_tuple %s4, %s5
  %s7 = sld [smem:[#allocation0]]
  $region46: #{tpu_custom_call.1} parent=0
    _
  %s9 = ssub.s32 1, %s7
  %s10 = scalar_select 0, %s9, %s7
  $region1: #{tpu_custom_call.1} parent=0
    #allocation3 [shape = 'u8[16384]{0}', space=vmem, size = 0x4000, scoped, tag = 'input window, operand 0, single buffered']
    #allocation4 [shape = 's32[1]{0}', space=sflag, size = 0x4, scoped, tag = 'scoped memory for tpu_custom_call.1']
    #allocation5 [shape = 's32[1]{0}', space=sflag, size = 0x4, scoped, tag = 'scoped memory for tpu_custom_call.1']
    #allocation6 [shape = 'u8[32768]{0}', space=vmem, size = 0x8000, scoped, tag = 'input window, operand 1, single buffered']
    #allocation7 [shape = 's32[1]{0}', space=sflag, size = 0x4, scoped, tag = 'scoped memory for tpu_custom_call.1']
    #allocation8 [shape = 'u8[32768]{0}', space=vmem, size = 0x8000, scoped, tag = 'input window, operand 2, single buffered']
    #allocation9 [shape = 'u8[32768]{0}', space=vmem, size = 0x8000, scoped, tag = 'output window, operand 0, single buffered']
    #allocation10 [shape = 'u8[4096]{0}', space=vmem, size = 0x1000, scoped, tag = 'output window, operand 1, single buffered']
    #allocation11 [shape = 's32[1]{0}', space=sflag, size = 0x4, scoped, tag = 'scoped memory for tpu_custom_call.1']
    %11 = vsyncpa [#allocation4], 0
    %12 = vsyncpa [#allocation7], 0
    %13 = vsyncpa [#allocation5], 0
    %14 = vsyncpa [#allocation11], 0
    // Predicated region
    $region2: #{tpu_custom_call.1} parent=1 // pred_check
      _
    $region3: #{tpu_custom_call.1} parent=1 // pred_check_branch
      %16 = sbr.rel (0) target = $region5
    $region4: #{tpu_custom_call.1} parent=1 // pred_region
      %s18 = ssub.s32 512, 512
      %19 = vsyncadd [#allocation4], %s18
      %s20 = sshll.u32 [#allocation3], 4
      %s21 = int_to_ptr.vmem [resolvable:$true] %s20
      %26 = dma.hbm_to_vmem [thread:$0]  %s0, 512, %s21, [#allocation4], 64, 64, 4
    $region5: #{tpu_custom_call.1} parent=1 // pred_fallthru
      _
    // Predicated region
    $region6: #{tpu_custom_call.1} parent=1 // pred_check
      _
    $region7: #{tpu_custom_call.1} parent=1 // pred_check_branch
      %28 = sbr.rel (0) target = $region9
    $region8: #{tpu_custom_call.1} parent=1 // pred_region
      %s30 = ssub.s32 1024, 1024
      %31 = vsyncadd [#allocation7], %s30
      %s32 = sshll.u32 [#allocation6], 4
      %s33 = int_to_ptr.vmem [resolvable:$true] %s32
      %38 = dma.hbm_to_vmem [thread:$0]  %s1, 1024, %s33, [#allocation7], 64, 64, 4
    $region9: #{tpu_custom_call.1} parent=1 // pred_fallthru
      _
    // Predicated region
    $region10: #{tpu_custom_call.1} parent=1 // pred_check
      _
    $region11: #{tpu_custom_call.1} parent=1 // pred_check_branch
      %40 = sbr.rel (0) target = $region13
    $region12: #{tpu_custom_call.1} parent=1 // pred_region
      %s42 = ssub.s32 1024, 1024
      %43 = vsyncadd [#allocation7], %s42
      %s44 = sshll.u32 [#allocation8], 4
      %s45 = int_to_ptr.vmem [resolvable:$true] %s44
      %50 = dma.hbm_to_vmem [thread:$0]  %s2, 1024, %s45, [#allocation7], 64, 64, 4
    $region13: #{tpu_custom_call.1} parent=1 // pred_fallthru
      _
    // Predicated region
    $region14: #{tpu_custom_call.1} parent=1 // pred_check
      _
    $region15: #{tpu_custom_call.1} parent=1 // pred_check_branch
      %52 = sbr.rel (0) target = $region17
    $region16: #{tpu_custom_call.1} parent=1 // pred_region
      _
    $region17: #{tpu_custom_call.1} parent=1 // pred_fallthru
      _
    // Predicated region
    $region18: #{tpu_custom_call.1} parent=1 // pred_check
      _
    $region19: #{tpu_custom_call.1} parent=1 // pred_check_branch
      %54 = sbr.rel (0) target = $region21
    $region20: #{tpu_custom_call.1} parent=1 // pred_region
      %55 = dma.done [#allocation4], 512
    $region21: #{tpu_custom_call.1} parent=1 // pred_fallthru
      _
    // Predicated region
    $region22: #{tpu_custom_call.1} parent=1 // pred_check
      _
    $region23: #{tpu_custom_call.1} parent=1 // pred_check_branch
      %57 = sbr.rel (0) target = $region25
    $region24: #{tpu_custom_call.1} parent=1 // pred_region
      %58 = dma.done [#allocation7], 1024
    $region25: #{tpu_custom_call.1} parent=1 // pred_fallthru
      _
    // Predicated region
    $region26: #{tpu_custom_call.1} parent=1 // pred_check
      _
    $region27: #{tpu_custom_call.1} parent=1 // pred_check_branch
      %60 = sbr.rel (0) target = $region29
    $region28: #{tpu_custom_call.1} parent=1 // pred_region
      %61 = dma.done [#allocation7], 1024
    $region29: #{tpu_custom_call.1} parent=1 // pred_fallthru
      _
    %v63 = vld [vmem:[#allocation3] sm:$0xf]
    %v64 = vld [vmem:[#allocation3 + $0x4] sm:$0xf]
    %v65 = vld [vmem:[#allocation3 + $0x8] sm:$0xf]
    %v66 = vld [vmem:[#allocation3 + $0xc] sm:$0xf]
    %v67 = vld [vmem:[#allocation3 + $0x10] sm:$0xf]
    %v68 = vld [vmem:[#allocation3 + $0x14] sm:$0xf]
    %v69 = vld [vmem:[#allocation3 + $0x18] sm:$0xf]
    %v70 = vld [vmem:[#allocation3 + $0x1c] sm:$0xf]
    %v71 = vld [vmem:[#allocation6] sm:$0xf]
    %v72 = vld [vmem:[#allocation6 + $0x4] sm:$0xf]
    %v73 = vld [vmem:[#allocation6 + $0x8] sm:$0xf]
    %v74 = vld [vmem:[#allocation6 + $0xc] sm:$0xf]
    %v75 = vld [vmem:[#allocation6 + $0x10] sm:$0xf]
    %v76 = vld [vmem:[#allocation6 + $0x14] sm:$0xf]
    %v77 = vld [vmem:[#allocation6 + $0x18] sm:$0xf]
    %v78 = vld [vmem:[#allocation6 + $0x1c] sm:$0xf]
    %v79 = vld [vmem:[#allocation6 + $0x20] sm:$0xf]
    %v80 = vld [vmem:[#allocation6 + $0x24] sm:$0xf]
    %v81 = vld [vmem:[#allocation6 + $0x28] sm:$0xf]
    %v82 = vld [vmem:[#allocation6 + $0x2c] sm:$0xf]
    %v83 = vld [vmem:[#allocation6 + $0x30] sm:$0xf]
    %v84 = vld [vmem:[#allocation6 + $0x34] sm:$0xf]
    %v85 = vld [vmem:[#allocation6 + $0x38] sm:$0xf]
    %v86 = vld [vmem:[#allocation6 + $0x3c] sm:$0xf]
    %v87 = vld [vmem:[%s3] sm:$0x1]
    %v89 = vlaneseq
    %v90 = vshrl.u32 %v89, 7
    %v91 = vsub.s32 0, %v90
    %v92 = vrot.slane %v87, %v91
    %v102 = vunpack.c.l.b16 %v63
    %v103 = vunpack.c.l.b16 %v64
    %v104 = vunpack.c.l.b16 %v65
    %v105 = vunpack.c.l.b16 %v66
    %v106 = vunpack.c.l.b16 %v67
    %v107 = vunpack.c.l.b16 %v68
    %v108 = vunpack.c.l.b16 %v69
    %v109 = vunpack.c.l.b16 %v70
    %v110 = vpack.c.b16 %v103, %v102
    %v111 = vpack.c.b16 %v105, %v104
    %v112 = vpack.c.b16 %v107, %v106
    %v113 = vpack.c.b16 %v109, %v108
    %v134 = vunpack.c.l.b16 %v71
    %v135 = vunpack.c.l.b16 %v72
    %v136 = vunpack.c.l.b16 %v73
    %v137 = vunpack.c.l.b16 %v74
    %v138 = vunpack.c.l.b16 %v75
    %v139 = vunpack.c.l.b16 %v76
    %v140 = vunpack.c.l.b16 %v77
    %v141 = vunpack.c.l.b16 %v78
    %v142 = vunpack.c.l.b16 %v79
    %v143 = vunpack.c.l.b16 %v80
    %v144 = vunpack.c.l.b16 %v81
    %v145 = vunpack.c.l.b16 %v82
    %v146 = vunpack.c.l.b16 %v83
    %v147 = vunpack.c.l.b16 %v84
    %v148 = vunpack.c.l.b16 %v85
    %v149 = vunpack.c.l.b16 %v86
    %v150 = vpack.c.b16 %v135, %v134
    %v151 = vpack.c.b16 %v137, %v136
    %v152 = vpack.c.b16 %v139, %v138
    %v153 = vpack.c.b16 %v141, %v140
    %v154 = vpack.c.b16 %v143, %v142
    %v155 = vpack.c.b16 %v145, %v144
    %v156 = vpack.c.b16 %v147, %v146
    %v157 = vpack.c.b16 %v149, %v148
    %166 = vmatprep.subr.bf16.mxu0 0
    %167 = vmatpush1.bf16.msra.mxu0 %v157
    %168 = vmatprep.subr.bf16.mxu0 0
    %169 = vmatpush1.bf16.msra.mxu0 %v156
    %170 = vmatprep.subr.bf16.mxu0 0
    %171 = vmatpush1.bf16.msra.mxu0 %v155
    %172 = vmatprep.subr.bf16.mxu0 0
    %173 = vmatpush1.bf16.msra.mxu0 %v154
    %174 = vmatprep.subr.bf16.mxu0 0
    %175 = vmatpush1.bf16.msra.mxu0 %v153
    %176 = vmatprep.subr.bf16.mxu0 0
    %177 = vmatpush1.bf16.msra.mxu0 %v152
    %178 = vmatprep.subr.bf16.mxu0 0
    %179 = vmatpush1.bf16.msra.mxu0 %v151
    %180 = vmatprep.subr.bf16.mxu0 0
    %181 = vmatpush1.bf16.msra.mxu0 %v150
    %182 = vmatprep.subr.bf16.mxu0 0
    %183 = vmatpush2.bf16.msra.mxu0 0
    %184 = vmatprep.subr.bf16.mxu0 0
    %185 = vmatpush2.bf16.msra.mxu0 0
    %186 = vmatprep.subr.bf16.mxu0 0
    %187 = vmatpush2.bf16.msra.mxu0 0
    %188 = vmatprep.subr.bf16.mxu0 0
    %189 = vmatpush2.bf16.msra.mxu0 0
    %190 = vmatprep.subr.bf16.mxu0 0
    %191 = vmatpush2.bf16.msra.mxu0 0
    %192 = vmatprep.subr.bf16.mxu0 0
    %193 = vmatpush2.bf16.msra.mxu0 0
    %194 = vmatprep.subr.bf16.mxu0 0
    %195 = vmatpush2.bf16.msra.mxu0 0
    %196 = vmatprep.subr.bf16.mxu0 0
    %197 = vmatpush2.bf16.msra.mxu0 0
    %198 = vmatprep.mubr.bf16.mxu0 0
    %199 = vmatmul.mubr.bf16.gmra.mxu0 %v110
    %v200 = vpop.f32.mrf.mxu0
    %v201 = vadd.f32 %v92, %v200
    %v202 = vpop.f32.mrf.mxu0
    %v203 = vpop.f32.mrf.mxu0
    %v204 = vadd.f32 %v92, %v203
    %v205 = vpop.f32.mrf.mxu0
    %206 = vmatprep.mubr.bf16.mxu0 0
    %207 = vmatmul.mubr.bf16.gmra.mxu0 %v111
    %v208 = vpop.f32.mrf.mxu0
    %v209 = vadd.f32 %v92, %v208
    %v210 = vpop.f32.mrf.mxu0
    %v211 = vpop.f32.mrf.mxu0
    %v212 = vadd.f32 %v92, %v211
    %v213 = vpop.f32.mrf.mxu0
    %214 = vmatprep.mubr.bf16.mxu0 0
    %215 = vmatmul.mubr.bf16.gmra.mxu0 %v112
    %v216 = vpop.f32.mrf.mxu0
    %v217 = vadd.f32 %v92, %v216
    %v218 = vpop.f32.mrf.mxu0
    %v219 = vpop.f32.mrf.mxu0
    %v220 = vadd.f32 %v92, %v219
    %v221 = vpop.f32.mrf.mxu0
    %222 = vmatprep.mubr.bf16.mxu0 0
    %223 = vmatmul.mubr.bf16.gmra.mxu0 %v113
    %v224 = vpop.f32.mrf.mxu0
    %v225 = vadd.f32 %v92, %v224
    %v226 = vpop.f32.mrf.mxu0
    %v227 = vpop.f32.mrf.mxu0
    %v228 = vadd.f32 %v92, %v227
    %v229 = vpop.f32.mrf.mxu0
    %230 = vdwg.mxu0
    %231 = vst [vmem:[#allocation2] sm:$0xff] %v201
    %232 = vst [vmem:[#allocation2 + $0x8] sm:$0xff] %v204
    %233 = vst [vmem:[#allocation2 + $0x10] sm:$0xff] %v209
    %234 = vst [vmem:[#allocation2 + $0x18] sm:$0xff] %v212
    %235 = vst [vmem:[#allocation2 + $0x20] sm:$0xff] %v217
    %236 = vst [vmem:[#allocation2 + $0x28] sm:$0xff] %v220
    %237 = vst [vmem:[#allocation2 + $0x30] sm:$0xff] %v225
    %238 = vst [vmem:[#allocation2 + $0x38] sm:$0xff] %v228
    %v239 = vld [vmem:[#allocation2] sm:$0xff]
    %v240 = vld [vmem:[#allocation8] sm:$0xf]
    %v241 = vld [vmem:[#allocation8 + $0x4] sm:$0xf]
    %v242 = vld [vmem:[#allocation8 + $0x8] sm:$0xf]
    %v243 = vld [vmem:[#allocation8 + $0xc] sm:$0xf]
    %v244 = vld [vmem:[#allocation8 + $0x10] sm:$0xf]
    %v245 = vld [vmem:[#allocation8 + $0x14] sm:$0xf]
    %v246 = vld [vmem:[#allocation8 + $0x18] sm:$0xf]
    %v247 = vld [vmem:[#allocation8 + $0x1c] sm:$0xf]
    %v248 = vld [vmem:[#allocation8 + $0x20] sm:$0xf]
    %v249 = vld [vmem:[#allocation8 + $0x24] sm:$0xf]
    %v250 = vld [vmem:[#allocation8 + $0x28] sm:$0xf]
    %v251 = vld [vmem:[#allocation8 + $0x2c] sm:$0xf]
    %v252 = vld [vmem:[#allocation8 + $0x30] sm:$0xf]
    %v253 = vld [vmem:[#allocation8 + $0x34] sm:$0xf]
    %v254 = vld [vmem:[#allocation8 + $0x38] sm:$0xf]
    %v255 = vld [vmem:[#allocation8 + $0x3c] sm:$0xf]
    %v272 = vunpack.c.l.b16 %v240
    %v273 = vunpack.c.l.b16 %v241
    %v274 = vunpack.c.l.b16 %v242
    %v275 = vunpack.c.l.b16 %v243
    %v276 = vunpack.c.l.b16 %v244
    %v277 = vunpack.c.l.b16 %v245
    %v278 = vunpack.c.l.b16 %v246
    %v279 = vunpack.c.l.b16 %v247
    %v280 = vunpack.c.l.b16 %v248
    %v281 = vunpack.c.l.b16 %v249
    %v282 = vunpack.c.l.b16 %v250
    %v283 = vunpack.c.l.b16 %v251
    %v284 = vunpack.c.l.b16 %v252
    %v285 = vunpack.c.l.b16 %v253
    %v286 = vunpack.c.l.b16 %v254
    %v287 = vunpack.c.l.b16 %v255
    %v288 = vpack.c.b16 %v273, %v272
    %v289 = vpack.c.b16 %v275, %v274
    %v290 = vpack.c.b16 %v277, %v276
    %v291 = vpack.c.b16 %v279, %v278
    %v292 = vpack.c.b16 %v281, %v280
    %v293 = vpack.c.b16 %v283, %v282
    %v294 = vpack.c.b16 %v285, %v284
    %v295 = vpack.c.b16 %v287, %v286
    %304 = vmatprep.subr.bf16.mxu0 0
    %305 = vmatpush1.bf16.msra.mxu0 %v295
    %306 = vmatprep.subr.bf16.mxu0 0
    %307 = vmatpush1.bf16.msra.mxu0 %v294
    %308 = vmatprep.subr.bf16.mxu0 0
    %309 = vmatpush1.bf16.msra.mxu0 %v293
    %310 = vmatprep.subr.bf16.mxu0 0
    %311 = vmatpush1.bf16.msra.mxu0 %v292
    %312 = vmatprep.subr.bf16.mxu0 0
    %313 = vmatpush1.bf16.msra.mxu0 %v291
    %314 = vmatprep.subr.bf16.mxu0 0
    %315 = vmatpush1.bf16.msra.mxu0 %v290
    %316 = vmatprep.subr.bf16.mxu0 0
    %317 = vmatpush1.bf16.msra.mxu0 %v289
    %318 = vmatprep.subr.bf16.mxu0 0
    %319 = vmatpush1.bf16.msra.mxu0 %v288
    %320 = vmatprep.subr.bf16.mxu0 0
    %321 = vmatpush2.bf16.msra.mxu0 0
    %322 = vmatprep.subr.bf16.mxu0 0
    %323 = vmatpush2.bf16.msra.mxu0 0
    %324 = vmatprep.subr.bf16.mxu0 0
    %325 = vmatpush2.bf16.msra.mxu0 0
    %326 = vmatprep.subr.bf16.mxu0 0
    %327 = vmatpush2.bf16.msra.mxu0 0
    %328 = vmatprep.subr.bf16.mxu0 0
    %329 = vmatpush2.bf16.msra.mxu0 0
    %330 = vmatprep.subr.bf16.mxu0 0
    %331 = vmatpush2.bf16.msra.mxu0 0
    %332 = vmatprep.subr.bf16.mxu0 0
    %333 = vmatpush2.bf16.msra.mxu0 0
    %334 = vmatprep.subr.bf16.mxu0 0
    %335 = vmatpush2.bf16.msra.mxu0 0
    %336 = vmatprep.mubr.bf16.mxu0 0
    %337 = vmatmul.mubr.bf16.gmra.mxu0 0
    %v338 = vpop.f32.mrf.mxu0
    %v339 = vadd.f32 0.0, %v338
    %v340 = vpop.f32.mrf.mxu0
    %v341 = vpop.f32.mrf.mxu0
    %v342 = vpop.f32.mrf.mxu0
    %343 = vdwg.mxu0
    %v344 = vadd.f32 %v239, %v339
    %v345 = vxor.u32 %v344, 2147483648
    %v346 = vmul.f32 %v345, 1.442695
    %v347 = vpow.pop %v346
    %v348 = vadd.f32 %v347, 1.0
    %v349 = vrcp.pop %v348
    %v350 = vmul.f32 1.0, %v349
    %v351 = vtanh.pop %v344
    %353 = vrot.lane.b32.xlu0 %v350, 96
    %v354 = vpop.permute.xlu0 %353
    %357 = vrot.lane.b32.xlu0 %v351, 64
    %v358 = vpop.permute.xlu0 %357
    %360 = vrot.lane.b32.xlu0 %v350, 32
    %v361 = vpop.permute.xlu0 %360
    %v363 = vmul.f32 %v354, 0.0
    %v364 = vmul.f32 %v350, %v358
    %v365 = vadd.f32 %v363, %v364
    %v366 = vtanh.pop %v365
    %v367 = vmul.f32 %v361, %v366
    %368 = vst [vmem:[#allocation9] sm:$0xff] %v367
    %v369 = vld [vmem:[#allocation2 + $0x8] sm:$0xff]
    %v370 = vpack.c.bf16 %v367, %v367
    %v371 = vld [vmem:[#allocation8] sm:$0xf]
    %v372 = vld [vmem:[#allocation8 + $0x4] sm:$0xf]
    %v373 = vld [vmem:[#allocation8 + $0x8] sm:$0xf]
    %v374 = vld [vmem:[#allocation8 + $0xc] sm:$0xf]
    %v375 = vld [vmem:[#allocation8 + $0x10] sm:$0xf]
    %v376 = vld [vmem:[#allocation8 + $0x14] sm:$0xf]
    %v377 = vld [vmem:[#allocation8 + $0x18] sm:$0xf]
    %v378 = vld [vmem:[#allocation8 + $0x1c] sm:$0xf]
    %v379 = vld [vmem:[#allocation8 + $0x20] sm:$0xf]
    %v380 = vld [vmem:[#allocation8 + $0x24] sm:$0xf]
    %v381 = vld [vmem:[#allocation8 + $0x28] sm:$0xf]
    %v382 = vld [vmem:[#allocation8 + $0x2c] sm:$0xf]
    %v383 = vld [vmem:[#allocation8 + $0x30] sm:$0xf]
    %v384 = vld [vmem:[#allocation8 + $0x34] sm:$0xf]
    %v385 = vld [vmem:[#allocation8 + $0x38] sm:$0xf]
    %v386 = vld [vmem:[#allocation8 + $0x3c] sm:$0xf]
    %v403 = vunpack.c.l.b16 %v371
    %v404 = vunpack.c.l.b16 %v372
    %v405 = vunpack.c.l.b16 %v373
    %v406 = vunpack.c.l.b16 %v374
    %v407 = vunpack.c.l.b16 %v375
    %v408 = vunpack.c.l.b16 %v376
    %v409 = vunpack.c.l.b16 %v377
    %v410 = vunpack.c.l.b16 %v378
    %v411 = vunpack.c.l.b16 %v379
    %v412 = vunpack.c.l.b16 %v380
    %v413 = vunpack.c.l.b16 %v381
    %v414 = vunpack.c.l.b16 %v382
    %v415 = vunpack.c.l.b16 %v383
    %v416 = vunpack.c.l.b16 %v384
    %v417 = vunpack.c.l.b16 %v385
    %v418 = vunpack.c.l.b16 %v386
    %v419 = vpack.c.b16 %v404, %v403
    %v420 = vpack.c.b16 %v406, %v405
    %v421 = vpack.c.b16 %v408, %v407
    %v422 = vpack.c.b16 %v410, %v409
    %v423 = vpack.c.b16 %v412, %v411
    %v424 = vpack.c.b16 %v414, %v413
    %v425 = vpack.c.b16 %v416, %v415
    %v426 = vpack.c.b16 %v418, %v417
    %435 = vmatprep.subr.bf16.mxu0 0
    %436 = vmatpush1.bf16.msra.mxu0 %v426
    %437 = vmatprep.subr.bf16.mxu0 0
    %438 = vmatpush1.bf16.msra.mxu0 %v425
    %439 = vmatprep.subr.bf16.mxu0 0
    %440 = vmatpush1.bf16.msra.mxu0 %v424
    %441 = vmatprep.subr.bf16.mxu0 0
    %442 = vmatpush1.bf16.msra.mxu0 %v423
    %443 = vmatprep.subr.bf16.mxu0 0
    %444 = vmatpush1.bf16.msra.mxu0 %v422
    %445 = vmatprep.subr.bf16.mxu0 0
    %446 = vmatpush1.bf16.msra.mxu0 %v421
    %447 = vmatprep.subr.bf16.mxu0 0
    %448 = vmatpush1.bf16.msra.mxu0 %v420
    %449 = vmatprep.subr.bf16.mxu0 0
    %450 = vmatpush1.bf16.msra.mxu0 %v419
    %451 = vmatprep.subr.bf16.mxu0 0
    %452 = vmatpush2.bf16.msra.mxu0 0
    %453 = vmatprep.subr.bf16.mxu0 0
    %454 = vmatpush2.bf16.msra.mxu0 0
    %455 = vmatprep.subr.bf16.mxu0 0
    %456 = vmatpush2.bf16.msra.mxu0 0
    %457 = vmatprep.subr.bf16.mxu0 0
    %458 = vmatpush2.bf16.msra.mxu0 0
    %459 = vmatprep.subr.bf16.mxu0 0
    %460 = vmatpush2.bf16.msra.mxu0 0
    %461 = vmatprep.subr.bf16.mxu0 0
    %462 = vmatpush2.bf16.msra.mxu0 0
    %463 = vmatprep.subr.bf16.mxu0 0
    %464 = vmatpush2.bf16.msra.mxu0 0
    %465 = vmatprep.subr.bf16.mxu0 0
    %466 = vmatpush2.bf16.msra.mxu0 0
    %467 = vmatprep.mubr.bf16.mxu0 0
    %468 = vmatmul.mubr.bf16.gmra.mxu0 %v370
    %v469 = vpop.f32.mrf.mxu0
    %v470 = vadd.f32 0.0, %v469
    %v471 = vpop.f32.mrf.mxu0
    %v472 = vpop.f32.mrf.mxu0
    %v473 = vpop.f32.mrf.mxu0
    %474 = vdwg.mxu0
    %v475 = vadd.f32 %v369, %v470
    %v476 = vxor.u32 %v475, 2147483648
    %v477 = vmul.f32 %v476, 1.442695
    %v478 = vpow.pop %v477
    %v479 = vadd.f32 %v478, 1.0
    %v480 = vrcp.pop %v479
    %v481 = vmul.f32 1.0, %v480
    %v482 = vtanh.pop %v475
    %484 = vrot.lane.b32.xlu0 %v481, 96
    %v485 = vpop.permute.xlu0 %484
    %488 = vrot.lane.b32.xlu0 %v482, 64
    %v489 = vpop.permute.xlu0 %488
    %491 = vrot.lane.b32.xlu0 %v481, 32
    %v492 = vpop.permute.xlu0 %491
    %v494 = vmul.f32 %v485, %v365
    %v495 = vmul.f32 %v481, %v489
    %v496 = vadd.f32 %v494, %v495
    %v497 = vtanh.pop %v496
    %v498 = vmul.f32 %v492, %v497
    %499 = vst [vmem:[#allocation9 + $0x8] sm:$0xff] %v498
    %v500 = vld [vmem:[#allocation2 + $0x10] sm:$0xff]
    %v501 = vpack.c.bf16 %v498, %v498
    %v502 = vld [vmem:[#allocation8] sm:$0xf]
    %v503 = vld [vmem:[#allocation8 + $0x4] sm:$0xf]
    %v504 = vld [vmem:[#allocation8 + $0x8] sm:$0xf]
    %v505 = vld [vmem:[#allocation8 + $0xc] sm:$0xf]
    %v506 = vld [vmem:[#allocation8 + $0x10] sm:$0xf]
    %v507 = vld [vmem:[#allocation8 + $0x14] sm:$0xf]
    %v508 = vld [vmem:[#allocation8 + $0x18] sm:$0xf]
    %v509 = vld [vmem:[#allocation8 + $0x1c] sm:$0xf]
    %v510 = vld [vmem:[#allocation8 + $0x20] sm:$0xf]
    %v511 = vld [vmem:[#allocation8 + $0x24] sm:$0xf]
    %v512 = vld [vmem:[#allocation8 + $0x28] sm:$0xf]
    %v513 = vld [vmem:[#allocation8 + $0x2c] sm:$0xf]
    %v514 = vld [vmem:[#allocation8 + $0x30] sm:$0xf]
    %v515 = vld [vmem:[#allocation8 + $0x34] sm:$0xf]
    %v516 = vld [vmem:[#allocation8 + $0x38] sm:$0xf]
    %v517 = vld [vmem:[#allocation8 + $0x3c] sm:$0xf]
    %v534 = vunpack.c.l.b16 %v502
    %v535 = vunpack.c.l.b16 %v503
    %v536 = vunpack.c.l.b16 %v504
    %v537 = vunpack.c.l.b16 %v505
    %v538 = vunpack.c.l.b16 %v506
    %v539 = vunpack.c.l.b16 %v507
    %v540 = vunpack.c.l.b16 %v508
    %v541 = vunpack.c.l.b16 %v509
    %v542 = vunpack.c.l.b16 %v510
    %v543 = vunpack.c.l.b16 %v511
    %v544 = vunpack.c.l.b16 %v512
    %v545 = vunpack.c.l.b16 %v513
    %v546 = vunpack.c.l.b16 %v514
    %v547 = vunpack.c.l.b16 %v515
    %v548 = vunpack.c.l.b16 %v516
    %v549 = vunpack.c.l.b16 %v517
    %v550 = vpack.c.b16 %v535, %v534
    %v551 = vpack.c.b16 %v537, %v536
    %v552 = vpack.c.b16 %v539, %v538
    %v553 = vpack.c.b16 %v541, %v540
    %v554 = vpack.c.b16 %v543, %v542
    %v555 = vpack.c.b16 %v545, %v544
    %v556 = vpack.c.b16 %v547, %v546
    %v557 = vpack.c.b16 %v549, %v548
    %566 = vmatprep.subr.bf16.mxu0 0
    %567 = vmatpush1.bf16.msra.mxu0 %v557
    %568 = vmatprep.subr.bf16.mxu0 0
    %569 = vmatpush1.bf16.msra.mxu0 %v556
    %570 = vmatprep.subr.bf16.mxu0 0
    %571 = vmatpush1.bf16.msra.mxu0 %v555
    %572 = vmatprep.subr.bf16.mxu0 0
    %573 = vmatpush1.bf16.msra.mxu0 %v554
    %574 = vmatprep.subr.bf16.mxu0 0
    %575 = vmatpush1.bf16.msra.mxu0 %v553
    %576 = vmatprep.subr.bf16.mxu0 0
    %577 = vmatpush1.bf16.msra.mxu0 %v552
    %578 = vmatprep.subr.bf16.mxu0 0
    %579 = vmatpush1.bf16.msra.mxu0 %v551
    %580 = vmatprep.subr.bf16.mxu0 0
    %581 = vmatpush1.bf16.msra.mxu0 %v550
    %582 = vmatprep.subr.bf16.mxu0 0
    %583 = vmatpush2.bf16.msra.mxu0 0
    %584 = vmatprep.subr.bf16.mxu0 0
    %585 = vmatpush2.bf16.msra.mxu0 0
    %586 = vmatprep.subr.bf16.mxu0 0
    %587 = vmatpush2.bf16.msra.mxu0 0
    %588 = vmatprep.subr.bf16.mxu0 0
    %589 = vmatpush2.bf16.msra.mxu0 0
    %590 = vmatprep.subr.bf16.mxu0 0
    %591 = vmatpush2.bf16.msra.mxu0 0
    %592 = vmatprep.subr.bf16.mxu0 0
    %593 = vmatpush2.bf16.msra.mxu0 0
    %594 = vmatprep.subr.bf16.mxu0 0
    %595 = vmatpush2.bf16.msra.mxu0 0
    %596 = vmatprep.subr.bf16.mxu0 0
    %597 = vmatpush2.bf16.msra.mxu0 0
    %598 = vmatprep.mubr.bf16.mxu0 0
    %599 = vmatmul.mubr.bf16.gmra.mxu0 %v501
    %v600 = vpop.f32.mrf.mxu0
    %v601 = vadd.f32 0.0, %v600
    %v602 = vpop.f32.mrf.mxu0
    %v603 = vpop.f32.mrf.mxu0
    %v604 = vpop.f32.mrf.mxu0
    %605 = vdwg.mxu0
    %v606 = vadd.f32 %v500, %v601
    %v607 = vxor.u32 %v606, 2147483648
    %v608 = vmul.f32 %v607, 1.442695
    %v609 = vpow.pop %v608
    %v610 = vadd.f32 %v609, 1.0
    %v611 = vrcp.pop %v610
    %v612 = vmul.f32 1.0, %v611
    %v613 = vtanh.pop %v606
    %615 = vrot.lane.b32.xlu0 %v612, 96
    %v616 = vpop.permute.xlu0 %615
    %619 = vrot.lane.b32.xlu0 %v613, 64
    %v620 = vpop.permute.xlu0 %619
    %622 = vrot.lane.b32.xlu0 %v612, 32
    %v623 = vpop.permute.xlu0 %622
    %v625 = vmul.f32 %v616, %v496
    %v626 = vmul.f32 %v612, %v620
    %v627 = vadd.f32 %v625, %v626
    %v628 = vtanh.pop %v627
    %v629 = vmul.f32 %v623, %v628
    %630 = vst [vmem:[#allocation9 + $0x10] sm:$0xff] %v629
    %v631 = vld [vmem:[#allocation2 + $0x18] sm:$0xff]
    %v632 = vpack.c.bf16 %v629, %v629
    %v633 = vld [vmem:[#allocation8] sm:$0xf]
    %v634 = vld [vmem:[#allocation8 + $0x4] sm:$0xf]
    %v635 = vld [vmem:[#allocation8 + $0x8] sm:$0xf]
    %v636 = vld [vmem:[#allocation8 + $0xc] sm:$0xf]
    %v637 = vld [vmem:[#allocation8 + $0x10] sm:$0xf]
    %v638 = vld [vmem:[#allocation8 + $0x14] sm:$0xf]
    %v639 = vld [vmem:[#allocation8 + $0x18] sm:$0xf]
    %v640 = vld [vmem:[#allocation8 + $0x1c] sm:$0xf]
    %v641 = vld [vmem:[#allocation8 + $0x20] sm:$0xf]
    %v642 = vld [vmem:[#allocation8 + $0x24] sm:$0xf]
    %v643 = vld [vmem:[#allocation8 + $0x28] sm:$0xf]
    %v644 = vld [vmem:[#allocation8 + $0x2c] sm:$0xf]
    %v645 = vld [vmem:[#allocation8 + $0x30] sm:$0xf]
    %v646 = vld [vmem:[#allocation8 + $0x34] sm:$0xf]
    %v647 = vld [vmem:[#allocation8 + $0x38] sm:$0xf]
    %v648 = vld [vmem:[#allocation8 + $0x3c] sm:$0xf]
    %v665 = vunpack.c.l.b16 %v633
    %v666 = vunpack.c.l.b16 %v634
    %v667 = vunpack.c.l.b16 %v635
    %v668 = vunpack.c.l.b16 %v636
    %v669 = vunpack.c.l.b16 %v637
    %v670 = vunpack.c.l.b16 %v638
    %v671 = vunpack.c.l.b16 %v639
    %v672 = vunpack.c.l.b16 %v640
    %v673 = vunpack.c.l.b16 %v641
    %v674 = vunpack.c.l.b16 %v642
    %v675 = vunpack.c.l.b16 %v643
    %v676 = vunpack.c.l.b16 %v644
    %v677 = vunpack.c.l.b16 %v645
    %v678 = vunpack.c.l.b16 %v646
    %v679 = vunpack.c.l.b16 %v647
    %v680 = vunpack.c.l.b16 %v648
    %v681 = vpack.c.b16 %v666, %v665
    %v682 = vpack.c.b16 %v668, %v667
    %v683 = vpack.c.b16 %v670, %v669
    %v684 = vpack.c.b16 %v672, %v671
    %v685 = vpack.c.b16 %v674, %v673
    %v686 = vpack.c.b16 %v676, %v675
    %v687 = vpack.c.b16 %v678, %v677
    %v688 = vpack.c.b16 %v680, %v679
    %697 = vmatprep.subr.bf16.mxu0 0
    %698 = vmatpush1.bf16.msra.mxu0 %v688
    %699 = vmatprep.subr.bf16.mxu0 0
    %700 = vmatpush1.bf16.msra.mxu0 %v687
    %701 = vmatprep.subr.bf16.mxu0 0
    %702 = vmatpush1.bf16.msra.mxu0 %v686
    %703 = vmatprep.subr.bf16.mxu0 0
    %704 = vmatpush1.bf16.msra.mxu0 %v685
    %705 = vmatprep.subr.bf16.mxu0 0
    %706 = vmatpush1.bf16.msra.mxu0 %v684
    %707 = vmatprep.subr.bf16.mxu0 0
    %708 = vmatpush1.bf16.msra.mxu0 %v683
    %709 = vmatprep.subr.bf16.mxu0 0
    %710 = vmatpush1.bf16.msra.mxu0 %v682
    %711 = vmatprep.subr.bf16.mxu0 0
    %712 = vmatpush1.bf16.msra.mxu0 %v681
    %713 = vmatprep.subr.bf16.mxu0 0
    %714 = vmatpush2.bf16.msra.mxu0 0
    %715 = vmatprep.subr.bf16.mxu0 0
    %716 = vmatpush2.bf16.msra.mxu0 0
    %717 = vmatprep.subr.bf16.mxu0 0
    %718 = vmatpush2.bf16.msra.mxu0 0
    %719 = vmatprep.subr.bf16.mxu0 0
    %720 = vmatpush2.bf16.msra.mxu0 0
    %721 = vmatprep.subr.bf16.mxu0 0
    %722 = vmatpush2.bf16.msra.mxu0 0
    %723 = vmatprep.subr.bf16.mxu0 0
    %724 = vmatpush2.bf16.msra.mxu0 0
    %725 = vmatprep.subr.bf16.mxu0 0
    %726 = vmatpush2.bf16.msra.mxu0 0
    %727 = vmatprep.subr.bf16.mxu0 0
    %728 = vmatpush2.bf16.msra.mxu0 0
    %729 = vmatprep.mubr.bf16.mxu0 0
    %730 = vmatmul.mubr.bf16.gmra.mxu0 %v632
    %v731 = vpop.f32.mrf.mxu0
    %v732 = vadd.f32 0.0, %v731
    %v733 = vpop.f32.mrf.mxu0
    %v734 = vpop.f32.mrf.mxu0
    %v735 = vpop.f32.mrf.mxu0
    %736 = vdwg.mxu0
    %v737 = vadd.f32 %v631, %v732
    %v738 = vxor.u32 %v737, 2147483648
    %v739 = vmul.f32 %v738, 1.442695
    %v740 = vpow.pop %v739
    %v741 = vadd.f32 %v740, 1.0
    %v742 = vrcp.pop %v741
    %v743 = vmul.f32 1.0, %v742
    %v744 = vtanh.pop %v737
    %746 = vrot.lane.b32.xlu0 %v743, 96
    %v747 = vpop.permute.xlu0 %746
    %750 = vrot.lane.b32.xlu0 %v744, 64
    %v751 = vpop.permute.xlu0 %750
    %753 = vrot.lane.b32.xlu0 %v743, 32
    %v754 = vpop.permute.xlu0 %753
    %v756 = vmul.f32 %v747, %v627
    %v757 = vmul.f32 %v743, %v751
    %v758 = vadd.f32 %v756, %v757
    %v759 = vtanh.pop %v758
    %v760 = vmul.f32 %v754, %v759
    %761 = vst [vmem:[#allocation9 + $0x18] sm:$0xff] %v760
    %v762 = vld [vmem:[#allocation2 + $0x20] sm:$0xff]
    %v763 = vpack.c.bf16 %v760, %v760
    %v764 = vld [vmem:[#allocation8] sm:$0xf]
    %v765 = vld [vmem:[#allocation8 + $0x4] sm:$0xf]
    %v766 = vld [vmem:[#allocation8 + $0x8] sm:$0xf]
    %v767 = vld [vmem:[#allocation8 + $0xc] sm:$0xf]
    %v768 = vld [vmem:[#allocation8 + $0x10] sm:$0xf]
    %v769 = vld [vmem:[#allocation8 + $0x14] sm:$0xf]
    %v770 = vld [vmem:[#allocation8 + $0x18] sm:$0xf]
    %v771 = vld [vmem:[#allocation8 + $0x1c] sm:$0xf]
    %v772 = vld [vmem:[#allocation8 + $0x20] sm:$0xf]
    %v773 = vld [vmem:[#allocation8 + $0x24] sm:$0xf]
    %v774 = vld [vmem:[#allocation8 + $0x28] sm:$0xf]
    %v775 = vld [vmem:[#allocation8 + $0x2c] sm:$0xf]
    %v776 = vld [vmem:[#allocation8 + $0x30] sm:$0xf]
    %v777 = vld [vmem:[#allocation8 + $0x34] sm:$0xf]
    %v778 = vld [vmem:[#allocation8 + $0x38] sm:$0xf]
    %v779 = vld [vmem:[#allocation8 + $0x3c] sm:$0xf]
    %v796 = vunpack.c.l.b16 %v764
    %v797 = vunpack.c.l.b16 %v765
    %v798 = vunpack.c.l.b16 %v766
    %v799 = vunpack.c.l.b16 %v767
    %v800 = vunpack.c.l.b16 %v768
    %v801 = vunpack.c.l.b16 %v769
    %v802 = vunpack.c.l.b16 %v770
    %v803 = vunpack.c.l.b16 %v771
    %v804 = vunpack.c.l.b16 %v772
    %v805 = vunpack.c.l.b16 %v773
    %v806 = vunpack.c.l.b16 %v774
    %v807 = vunpack.c.l.b16 %v775
    %v808 = vunpack.c.l.b16 %v776
    %v809 = vunpack.c.l.b16 %v777
    %v810 = vunpack.c.l.b16 %v778
    %v811 = vunpack.c.l.b16 %v779
    %v812 = vpack.c.b16 %v797, %v796
    %v813 = vpack.c.b16 %v799, %v798
    %v814 = vpack.c.b16 %v801, %v800
    %v815 = vpack.c.b16 %v803, %v802
    %v816 = vpack.c.b16 %v805, %v804
    %v817 = vpack.c.b16 %v807, %v806
    %v818 = vpack.c.b16 %v809, %v808
    %v819 = vpack.c.b16 %v811, %v810
    %828 = vmatprep.subr.bf16.mxu0 0
    %829 = vmatpush1.bf16.msra.mxu0 %v819
    %830 = vmatprep.subr.bf16.mxu0 0
    %831 = vmatpush1.bf16.msra.mxu0 %v818
    %832 = vmatprep.subr.bf16.mxu0 0
    %833 = vmatpush1.bf16.msra.mxu0 %v817
    %834 = vmatprep.subr.bf16.mxu0 0
    %835 = vmatpush1.bf16.msra.mxu0 %v816
    %836 = vmatprep.subr.bf16.mxu0 0
    %837 = vmatpush1.bf16.msra.mxu0 %v815
    %838 = vmatprep.subr.bf16.mxu0 0
    %839 = vmatpush1.bf16.msra.mxu0 %v814
    %840 = vmatprep.subr.bf16.mxu0 0
    %841 = vmatpush1.bf16.msra.mxu0 %v813
    %842 = vmatprep.subr.bf16.mxu0 0
    %843 = vmatpush1.bf16.msra.mxu0 %v812
    %844 = vmatprep.subr.bf16.mxu0 0
    %845 = vmatpush2.bf16.msra.mxu0 0
    %846 = vmatprep.subr.bf16.mxu0 0
    %847 = vmatpush2.bf16.msra.mxu0 0
    %848 = vmatprep.subr.bf16.mxu0 0
    %849 = vmatpush2.bf16.msra.mxu0 0
    %850 = vmatprep.subr.bf16.mxu0 0
    %851 = vmatpush2.bf16.msra.mxu0 0
    %852 = vmatprep.subr.bf16.mxu0 0
    %853 = vmatpush2.bf16.msra.mxu0 0
    %854 = vmatprep.subr.bf16.mxu0 0
    %855 = vmatpush2.bf16.msra.mxu0 0
    %856 = vmatprep.subr.bf16.mxu0 0
    %857 = vmatpush2.bf16.msra.mxu0 0
    %858 = vmatprep.subr.bf16.mxu0 0
    %859 = vmatpush2.bf16.msra.mxu0 0
    %860 = vmatprep.mubr.bf16.mxu0 0
    %861 = vmatmul.mubr.bf16.gmra.mxu0 %v763
    %v862 = vpop.f32.mrf.mxu0
    %v863 = vadd.f32 0.0, %v862
    %v864 = vpop.f32.mrf.mxu0
    %v865 = vpop.f32.mrf.mxu0
    %v866 = vpop.f32.mrf.mxu0
    %867 = vdwg.mxu0
    %v868 = vadd.f32 %v762, %v863
    %v869 = vxor.u32 %v868, 2147483648
    %v870 = vmul.f32 %v869, 1.442695
    %v871 = vpow.pop %v870
    %v872 = vadd.f32 %v871, 1.0
    %v873 = vrcp.pop %v872
    %v874 = vmul.f32 1.0, %v873
    %v875 = vtanh.pop %v868
    %877 = vrot.lane.b32.xlu0 %v874, 96
    %v878 = vpop.permute.xlu0 %877
    %881 = vrot.lane.b32.xlu0 %v875, 64
    %v882 = vpop.permute.xlu0 %881
    %884 = vrot.lane.b32.xlu0 %v874, 32
    %v885 = vpop.permute.xlu0 %884
    %v887 = vmul.f32 %v878, %v758
    %v888 = vmul.f32 %v874, %v882
    %v889 = vadd.f32 %v887, %v888
    %v890 = vtanh.pop %v889
    %v891 = vmul.f32 %v885, %v890
    %892 = vst [vmem:[#allocation9 + $0x20] sm:$0xff] %v891
    %v893 = vld [vmem:[#allocation2 + $0x28] sm:$0xff]
    %v894 = vpack.c.bf16 %v891, %v891
    %v895 = vld [vmem:[#allocation8] sm:$0xf]
    %v896 = vld [vmem:[#allocation8 + $0x4] sm:$0xf]
    %v897 = vld [vmem:[#allocation8 + $0x8] sm:$0xf]
    %v898 = vld [vmem:[#allocation8 + $0xc] sm:$0xf]
    %v899 = vld [vmem:[#allocation8 + $0x10] sm:$0xf]
    %v900 = vld [vmem:[#allocation8 + $0x14] sm:$0xf]
    %v901 = vld [vmem:[#allocation8 + $0x18] sm:$0xf]
    %v902 = vld [vmem:[#allocation8 + $0x1c] sm:$0xf]
    %v903 = vld [vmem:[#allocation8 + $0x20] sm:$0xf]
    %v904 = vld [vmem:[#allocation8 + $0x24] sm:$0xf]
    %v905 = vld [vmem:[#allocation8 + $0x28] sm:$0xf]
    %v906 = vld [vmem:[#allocation8 + $0x2c] sm:$0xf]
    %v907 = vld [vmem:[#allocation8 + $0x30] sm:$0xf]
    %v908 = vld [vmem:[#allocation8 + $0x34] sm:$0xf]
    %v909 = vld [vmem:[#allocation8 + $0x38] sm:$0xf]
    %v910 = vld [vmem:[#allocation8 + $0x3c] sm:$0xf]
    %v927 = vunpack.c.l.b16 %v895
    %v928 = vunpack.c.l.b16 %v896
    %v929 = vunpack.c.l.b16 %v897
    %v930 = vunpack.c.l.b16 %v898
    %v931 = vunpack.c.l.b16 %v899
    %v932 = vunpack.c.l.b16 %v900
    %v933 = vunpack.c.l.b16 %v901
    %v934 = vunpack.c.l.b16 %v902
    %v935 = vunpack.c.l.b16 %v903
    %v936 = vunpack.c.l.b16 %v904
    %v937 = vunpack.c.l.b16 %v905
    %v938 = vunpack.c.l.b16 %v906
    %v939 = vunpack.c.l.b16 %v907
    %v940 = vunpack.c.l.b16 %v908
    %v941 = vunpack.c.l.b16 %v909
    %v942 = vunpack.c.l.b16 %v910
    %v943 = vpack.c.b16 %v928, %v927
    %v944 = vpack.c.b16 %v930, %v929
    %v945 = vpack.c.b16 %v932, %v931
    %v946 = vpack.c.b16 %v934, %v933
    %v947 = vpack.c.b16 %v936, %v935
    %v948 = vpack.c.b16 %v938, %v937
    %v949 = vpack.c.b16 %v940, %v939
    %v950 = vpack.c.b16 %v942, %v941
    %959 = vmatprep.subr.bf16.mxu0 0
    %960 = vmatpush1.bf16.msra.mxu0 %v950
    %961 = vmatprep.subr.bf16.mxu0 0
    %962 = vmatpush1.bf16.msra.mxu0 %v949
    %963 = vmatprep.subr.bf16.mxu0 0
    %964 = vmatpush1.bf16.msra.mxu0 %v948
    %965 = vmatprep.subr.bf16.mxu0 0
    %966 = vmatpush1.bf16.msra.mxu0 %v947
    %967 = vmatprep.subr.bf16.mxu0 0
    %968 = vmatpush1.bf16.msra.mxu0 %v946
    %969 = vmatprep.subr.bf16.mxu0 0
    %970 = vmatpush1.bf16.msra.mxu0 %v945
    %971 = vmatprep.subr.bf16.mxu0 0
    %972 = vmatpush1.bf16.msra.mxu0 %v944
    %973 = vmatprep.subr.bf16.mxu0 0
    %974 = vmatpush1.bf16.msra.mxu0 %v943
    %975 = vmatprep.subr.bf16.mxu0 0
    %976 = vmatpush2.bf16.msra.mxu0 0
    %977 = vmatprep.subr.bf16.mxu0 0
    %978 = vmatpush2.bf16.msra.mxu0 0
    %979 = vmatprep.subr.bf16.mxu0 0
    %980 = vmatpush2.bf16.msra.mxu0 0
    %981 = vmatprep.subr.bf16.mxu0 0
    %982 = vmatpush2.bf16.msra.mxu0 0
    %983 = vmatprep.subr.bf16.mxu0 0
    %984 = vmatpush2.bf16.msra.mxu0 0
    %985 = vmatprep.subr.bf16.mxu0 0
    %986 = vmatpush2.bf16.msra.mxu0 0
    %987 = vmatprep.subr.bf16.mxu0 0
    %988 = vmatpush2.bf16.msra.mxu0 0
    %989 = vmatprep.subr.bf16.mxu0 0
    %990 = vmatpush2.bf16.msra.mxu0 0
    %991 = vmatprep.mubr.bf16.mxu0 0
    %992 = vmatmul.mubr.bf16.gmra.mxu0 %v894
    %v993 = vpop.f32.mrf.mxu0
    %v994 = vadd.f32 0.0, %v993
    %v995 = vpop.f32.mrf.mxu0
    %v996 = vpop.f32.mrf.mxu0
    %v997 = vpop.f32.mrf.mxu0
    %998 = vdwg.mxu0
    %v999 = vadd.f32 %v893, %v994
    %v1000 = vxor.u32 %v999, 2147483648
    %v1001 = vmul.f32 %v1000, 1.442695
    %v1002 = vpow.pop %v1001
    %v1003 = vadd.f32 %v1002, 1.0
    %v1004 = vrcp.pop %v1003
    %v1005 = vmul.f32 1.0, %v1004
    %v1006 = vtanh.pop %v999
    %1008 = vrot.lane.b32.xlu0 %v1005, 96
    %v1009 = vpop.permute.xlu0 %1008
    %1012 = vrot.lane.b32.xlu0 %v1006, 64
    %v1013 = vpop.permute.xlu0 %1012
    %1015 = vrot.lane.b32.xlu0 %v1005, 32
    %v1016 = vpop.permute.xlu0 %1015
    %v1018 = vmul.f32 %v1009, %v889
    %v1019 = vmul.f32 %v1005, %v1013
    %v1020 = vadd.f32 %v1018, %v1019
    %v1021 = vtanh.pop %v1020
    %v1022 = vmul.f32 %v1016, %v1021
    %1023 = vst [vmem:[#allocation9 + $0x28] sm:$0xff] %v1022
    %v1024 = vld [vmem:[#allocation2 + $0x30] sm:$0xff]
    %v1025 = vpack.c.bf16 %v1022, %v1022
    %v1026 = vld [vmem:[#allocation8] sm:$0xf]
    %v1027 = vld [vmem:[#allocation8 + $0x4] sm:$0xf]
    %v1028 = vld [vmem:[#allocation8 + $0x8] sm:$0xf]
    %v1029 = vld [vmem:[#allocation8 + $0xc] sm:$0xf]
    %v1030 = vld [vmem:[#allocation8 + $0x10] sm:$0xf]
    %v1031 = vld [vmem:[#allocation8 + $0x14] sm:$0xf]
    %v1032 = vld [vmem:[#allocation8 + $0x18] sm:$0xf]
    %v1033 = vld [vmem:[#allocation8 + $0x1c] sm:$0xf]
    %v1034 = vld [vmem:[#allocation8 + $0x20] sm:$0xf]
    %v1035 = vld [vmem:[#allocation8 + $0x24] sm:$0xf]
    %v1036 = vld [vmem:[#allocation8 + $0x28] sm:$0xf]
    %v1037 = vld [vmem:[#allocation8 + $0x2c] sm:$0xf]
    %v1038 = vld [vmem:[#allocation8 + $0x30] sm:$0xf]
    %v1039 = vld [vmem:[#allocation8 + $0x34] sm:$0xf]
    %v1040 = vld [vmem:[#allocation8 + $0x38] sm:$0xf]
    %v1041 = vld [vmem:[#allocation8 + $0x3c] sm:$0xf]
    %v1058 = vunpack.c.l.b16 %v1026
    %v1059 = vunpack.c.l.b16 %v1027
    %v1060 = vunpack.c.l.b16 %v1028
    %v1061 = vunpack.c.l.b16 %v1029
    %v1062 = vunpack.c.l.b16 %v1030
    %v1063 = vunpack.c.l.b16 %v1031
    %v1064 = vunpack.c.l.b16 %v1032
    %v1065 = vunpack.c.l.b16 %v1033
    %v1066 = vunpack.c.l.b16 %v1034
    %v1067 = vunpack.c.l.b16 %v1035
    %v1068 = vunpack.c.l.b16 %v1036
    %v1069 = vunpack.c.l.b16 %v1037
    %v1070 = vunpack.c.l.b16 %v1038
    %v1071 = vunpack.c.l.b16 %v1039
    %v1072 = vunpack.c.l.b16 %v1040
    %v1073 = vunpack.c.l.b16 %v1041
    %v1074 = vpack.c.b16 %v1059, %v1058
    %v1075 = vpack.c.b16 %v1061, %v1060
    %v1076 = vpack.c.b16 %v1063, %v1062
    %v1077 = vpack.c.b16 %v1065, %v1064
    %v1078 = vpack.c.b16 %v1067, %v1066
    %v1079 = vpack.c.b16 %v1069, %v1068
    %v1080 = vpack.c.b16 %v1071, %v1070
    %v1081 = vpack.c.b16 %v1073, %v1072
    %1090 = vmatprep.subr.bf16.mxu0 0
    %1091 = vmatpush1.bf16.msra.mxu0 %v1081
    %1092 = vmatprep.subr.bf16.mxu0 0
    %1093 = vmatpush1.bf16.msra.mxu0 %v1080
    %1094 = vmatprep.subr.bf16.mxu0 0
    %1095 = vmatpush1.bf16.msra.mxu0 %v1079
    %1096 = vmatprep.subr.bf16.mxu0 0
    %1097 = vmatpush1.bf16.msra.mxu0 %v1078
    %1098 = vmatprep.subr.bf16.mxu0 0
    %1099 = vmatpush1.bf16.msra.mxu0 %v1077
    %1100 = vmatprep.subr.bf16.mxu0 0
    %1101 = vmatpush1.bf16.msra.mxu0 %v1076
    %1102 = vmatprep.subr.bf16.mxu0 0
    %1103 = vmatpush1.bf16.msra.mxu0 %v1075
    %1104 = vmatprep.subr.bf16.mxu0 0
    %1105 = vmatpush1.bf16.msra.mxu0 %v1074
    %1106 = vmatprep.subr.bf16.mxu0 0
    %1107 = vmatpush2.bf16.msra.mxu0 0
    %1108 = vmatprep.subr.bf16.mxu0 0
    %1109 = vmatpush2.bf16.msra.mxu0 0
    %1110 = vmatprep.subr.bf16.mxu0 0
    %1111 = vmatpush2.bf16.msra.mxu0 0
    %1112 = vmatprep.subr.bf16.mxu0 0
    %1113 = vmatpush2.bf16.msra.mxu0 0
    %1114 = vmatprep.subr.bf16.mxu0 0
    %1115 = vmatpush2.bf16.msra.mxu0 0
    %1116 = vmatprep.subr.bf16.mxu0 0
    %1117 = vmatpush2.bf16.msra.mxu0 0
    %1118 = vmatprep.subr.bf16.mxu0 0
    %1119 = vmatpush2.bf16.msra.mxu0 0
    %1120 = vmatprep.subr.bf16.mxu0 0
    %1121 = vmatpush2.bf16.msra.mxu0 0
    %1122 = vmatprep.mubr.bf16.mxu0 0
    %1123 = vmatmul.mubr.bf16.gmra.mxu0 %v1025
    %v1124 = vpop.f32.mrf.mxu0
    %v1125 = vadd.f32 0.0, %v1124
    %v1126 = vpop.f32.mrf.mxu0
    %v1127 = vpop.f32.mrf.mxu0
    %v1128 = vpop.f32.mrf.mxu0
    %1129 = vdwg.mxu0
    %v1130 = vadd.f32 %v1024, %v1125
    %v1131 = vxor.u32 %v1130, 2147483648
    %v1132 = vmul.f32 %v1131, 1.442695
    %v1133 = vpow.pop %v1132
    %v1134 = vadd.f32 %v1133, 1.0
    %v1135 = vrcp.pop %v1134
    %v1136 = vmul.f32 1.0, %v1135
    %v1137 = vtanh.pop %v1130
    %1139 = vrot.lane.b32.xlu0 %v1136, 96
    %v1140 = vpop.permute.xlu0 %1139
    %1143 = vrot.lane.b32.xlu0 %v1137, 64
    %v1144 = vpop.permute.xlu0 %1143
    %1146 = vrot.lane.b32.xlu0 %v1136, 32
    %v1147 = vpop.permute.xlu0 %1146
    %v1149 = vmul.f32 %v1140, %v1020
    %v1150 = vmul.f32 %v1136, %v1144
    %v1151 = vadd.f32 %v1149, %v1150
    %v1152 = vtanh.pop %v1151
    %v1153 = vmul.f32 %v1147, %v1152
    %1154 = vst [vmem:[#allocation9 + $0x30] sm:$0xff] %v1153
    %v1155 = vld [vmem:[#allocation2 + $0x38] sm:$0xff]
    %v1156 = vpack.c.bf16 %v1153, %v1153
    %v1157 = vld [vmem:[#allocation8] sm:$0xf]
    %v1158 = vld [vmem:[#allocation8 + $0x4] sm:$0xf]
    %v1159 = vld [vmem:[#allocation8 + $0x8] sm:$0xf]
    %v1160 = vld [vmem:[#allocation8 + $0xc] sm:$0xf]
    %v1161 = vld [vmem:[#allocation8 + $0x10] sm:$0xf]
    %v1162 = vld [vmem:[#allocation8 + $0x14] sm:$0xf]
    %v1163 = vld [vmem:[#allocation8 + $0x18] sm:$0xf]
    %v1164 = vld [vmem:[#allocation8 + $0x1c] sm:$0xf]
    %v1165 = vld [vmem:[#allocation8 + $0x20] sm:$0xf]
    %v1166 = vld [vmem:[#allocation8 + $0x24] sm:$0xf]
    %v1167 = vld [vmem:[#allocation8 + $0x28] sm:$0xf]
    %v1168 = vld [vmem:[#allocation8 + $0x2c] sm:$0xf]
    %v1169 = vld [vmem:[#allocation8 + $0x30] sm:$0xf]
    %v1170 = vld [vmem:[#allocation8 + $0x34] sm:$0xf]
    %v1171 = vld [vmem:[#allocation8 + $0x38] sm:$0xf]
    %v1172 = vld [vmem:[#allocation8 + $0x3c] sm:$0xf]
    %v1189 = vunpack.c.l.b16 %v1157
    %v1190 = vunpack.c.l.b16 %v1158
    %v1191 = vunpack.c.l.b16 %v1159
    %v1192 = vunpack.c.l.b16 %v1160
    %v1193 = vunpack.c.l.b16 %v1161
    %v1194 = vunpack.c.l.b16 %v1162
    %v1195 = vunpack.c.l.b16 %v1163
    %v1196 = vunpack.c.l.b16 %v1164
    %v1197 = vunpack.c.l.b16 %v1165
    %v1198 = vunpack.c.l.b16 %v1166
    %v1199 = vunpack.c.l.b16 %v1167
    %v1200 = vunpack.c.l.b16 %v1168
    %v1201 = vunpack.c.l.b16 %v1169
    %v1202 = vunpack.c.l.b16 %v1170
    %v1203 = vunpack.c.l.b16 %v1171
    %v1204 = vunpack.c.l.b16 %v1172
    %v1205 = vpack.c.b16 %v1190, %v1189
    %v1206 = vpack.c.b16 %v1192, %v1191
    %v1207 = vpack.c.b16 %v1194, %v1193
    %v1208 = vpack.c.b16 %v1196, %v1195
    %v1209 = vpack.c.b16 %v1198, %v1197
    %v1210 = vpack.c.b16 %v1200, %v1199
    %v1211 = vpack.c.b16 %v1202, %v1201
    %v1212 = vpack.c.b16 %v1204, %v1203
    %1221 = vmatprep.subr.bf16.mxu0 0
    %1222 = vmatpush1.bf16.msra.mxu0 %v1212
    %1223 = vmatprep.subr.bf16.mxu0 0
    %1224 = vmatpush1.bf16.msra.mxu0 %v1211
    %1225 = vmatprep.subr.bf16.mxu0 0
    %1226 = vmatpush1.bf16.msra.mxu0 %v1210
    %1227 = vmatprep.subr.bf16.mxu0 0
    %1228 = vmatpush1.bf16.msra.mxu0 %v1209
    %1229 = vmatprep.subr.bf16.mxu0 0
    %1230 = vmatpush1.bf16.msra.mxu0 %v1208
    %1231 = vmatprep.subr.bf16.mxu0 0
    %1232 = vmatpush1.bf16.msra.mxu0 %v1207
    %1233 = vmatprep.subr.bf16.mxu0 0
    %1234 = vmatpush1.bf16.msra.mxu0 %v1206
    %1235 = vmatprep.subr.bf16.mxu0 0
    %1236 = vmatpush1.bf16.msra.mxu0 %v1205
    %1237 = vmatprep.subr.bf16.mxu0 0
    %1238 = vmatpush2.bf16.msra.mxu0 0
    %1239 = vmatprep.subr.bf16.mxu0 0
    %1240 = vmatpush2.bf16.msra.mxu0 0
    %1241 = vmatprep.subr.bf16.mxu0 0
    %1242 = vmatpush2.bf16.msra.mxu0 0
    %1243 = vmatprep.subr.bf16.mxu0 0
    %1244 = vmatpush2.bf16.msra.mxu0 0
    %1245 = vmatprep.subr.bf16.mxu0 0
    %1246 = vmatpush2.bf16.msra.mxu0 0
    %1247 = vmatprep.subr.bf16.mxu0 0
    %1248 = vmatpush2.bf16.msra.mxu0 0
    %1249 = vmatprep.subr.bf16.mxu0 0
    %1250 = vmatpush2.bf16.msra.mxu0 0
    %1251 = vmatprep.subr.bf16.mxu0 0
    %1252 = vmatpush2.bf16.msra.mxu0 0
    %1253 = vmatprep.mubr.bf16.mxu0 0
    %1254 = vmatmul.mubr.bf16.gmra.mxu0 %v1156
    %v1255 = vpop.f32.mrf.mxu0
    %v1256 = vadd.f32 0.0, %v1255
    %v1257 = vpop.f32.mrf.mxu0
    %v1258 = vpop.f32.mrf.mxu0
    %v1259 = vpop.f32.mrf.mxu0
    %1260 = vdwg.mxu0
    %v1261 = vadd.f32 %v1155, %v1256
    %v1262 = vxor.u32 %v1261, 2147483648
    %v1263 = vmul.f32 %v1262, 1.442695
    %v1264 = vpow.pop %v1263
    %v1265 = vadd.f32 %v1264, 1.0
    %v1266 = vrcp.pop %v1265
    %v1267 = vmul.f32 1.0, %v1266
    %v1268 = vtanh.pop %v1261
    %1270 = vrot.lane.b32.xlu0 %v1267, 96
    %v1271 = vpop.permute.xlu0 %1270
    %1274 = vrot.lane.b32.xlu0 %v1268, 64
    %v1275 = vpop.permute.xlu0 %1274
    %1277 = vrot.lane.b32.xlu0 %v1267, 32
    %v1278 = vpop.permute.xlu0 %1277
    %v1280 = vmul.f32 %v1271, %v1151
    %v1281 = vmul.f32 %v1267, %v1275
    %v1282 = vadd.f32 %v1280, %v1281
    %v1283 = vtanh.pop %v1282
    %v1284 = vmul.f32 %v1278, %v1283
    %1285 = vst [vmem:[#allocation9 + $0x38] sm:$0xff] %v1284
    %1286 = vst [vmem:[#allocation10] sm:$0xff] %v1282
    // Predicated region
    $region30: #{tpu_custom_call.1} parent=1 // pred_check
      _
    $region31: #{tpu_custom_call.1} parent=1 // pred_check_branch
      %1288 = sbr.rel (0) target = $region33
    $region32: #{tpu_custom_call.1} parent=1 // pred_region
      %s1290 = ssub.s32 1024, 1024
      %1291 = vsyncadd [#allocation5], %s1290
      %s1293 = sshll.u32 [#allocation9], 4
      %s1294 = int_to_ptr.vmem [resolvable:$true] %s1293
      %1296 = dma.vmem_to_hbm [thread:$0]  %s1294, 1024, %s4, [#allocation5]
    $region33: #{tpu_custom_call.1} parent=1 // pred_fallthru
      _
    // Predicated region
    $region34: #{tpu_custom_call.1} parent=1 // pred_check
      _
    $region35: #{tpu_custom_call.1} parent=1 // pred_check_branch
      %1298 = sbr.rel (0) target = $region37
    $region36: #{tpu_custom_call.1} parent=1 // pred_region
      %s1300 = ssub.s32 128, 128
      %1301 = vsyncadd [#allocation11], %s1300
      %s1303 = sshll.u32 [#allocation10], 4
      %s1304 = int_to_ptr.vmem [resolvable:$true] %s1303
      %1306 = dma.vmem_to_hbm [thread:$0]  %s1304, 128, %s5, [#allocation11]
    $region37: #{tpu_custom_call.1} parent=1 // pred_fallthru
      _
    // Predicated region
    $region38: #{tpu_custom_call.1} parent=1 // pred_check
      _
    $region39: #{tpu_custom_call.1} parent=1 // pred_check_branch
      %1308 = sbr.rel (0) target = $region41
    $region40: #{tpu_custom_call.1} parent=1 // pred_region
      %1309 = dma.done [#allocation5], 1024
    $region41: #{tpu_custom_call.1} parent=1 // pred_fallthru
      _
    // Predicated region
    $region42: #{tpu_custom_call.1} parent=1 // pred_check
      _
    $region43: #{tpu_custom_call.1} parent=1 // pred_check_branch
      %1311 = sbr.rel (0) target = $region45
    $region44: #{tpu_custom_call.1} parent=1 // pred_region
      %1312 = dma.done [#allocation11], 128
    $region45: #{tpu_custom_call.1} parent=1 // pred_fallthru
      _
    %1313 = vsyncpa [#allocation4], 1
    %1314 = vsyncpa [#allocation7], 1
    %1315 = vsyncpa [#allocation5], 1
    %1316 = vsyncpa [#allocation11], 1

</llo_original>
